<compile_context>
chip_gen: v5e
topology: v5e:2x2
jax: 0.10.0
libtpu: 0.0.40
codegen_flags: <defaults>
</compile_context>

<pallas_src>
import jax
import jax.numpy as jnp
from jax.experimental import pallas as pl
from jax.experimental.pallas import tpu as pltpu

_HALO = 3          # MaxPool2d(7, 1, 3) -> 3-pixel halo on each side
_HB = 8            # bottom-halo block rows (>= 6, multiple of 8)


def _cam_kernel(a_ref, b_ref, w1_ref, t1_ref, w2_ref, t2_ref, out_ref,
                rowmax_ref):
    """One (batch, row-tile) per grid step.

    a_ref      : (1, TH,  W+6, C) f32  padded rows [i*TH, i*TH+TH)      (main)
    b_ref      : (1, 8,   W+6, C) f32  padded rows [i*TH+TH, i*TH+TH+8) (halo)
    w1_ref     : (C, Cr)  bf16   folded squeeze conv + BN
    t1_ref     : (1, Cr)  f32
    w2_ref     : (Cr, C)  bf16   folded unsqueeze conv + BN
    t2_ref     : (1, C)   f32
    out_ref    : (1, TH, W, C) f32
    rowmax_ref : (TH+6, W, C) f32 VMEM scratch (W-direction max, stitched)
    """
    _, TH, W, C = out_ref.shape

    # ---- separable 7x7 max-pool, log-step doubling (window 2 -> 4 -> 7) ----
    # W direction on the TH main-tile rows ...
    s2 = jnp.maximum(a_ref[0, :, 0:W + 5, :], a_ref[0, :, 1:W + 6, :])
    s4 = jnp.maximum(s2[:, 0:W + 3, :], s2[:, 2:W + 5, :])
    rowmax_ref[0:TH] = jnp.maximum(s4[:, 0:W, :], s4[:, 3:W + 3, :])
    # ... and on the 6 halo rows coming from the next row tile.
    s2 = jnp.maximum(b_ref[0, 0:6, 0:W + 5, :], b_ref[0, 0:6, 1:W + 6, :])
    s4 = jnp.maximum(s2[:, 0:W + 3, :], s2[:, 2:W + 5, :])
    rowmax_ref[TH:TH + 6] = jnp.maximum(s4[:, 0:W, :], s4[:, 3:W + 3, :])
    # H direction over the stitched (TH+6, W, C) scratch; these slices are on
    # the outer axis -> no lane/sublane relayout.
    h2 = jnp.maximum(rowmax_ref[0:TH + 5], rowmax_ref[1:TH + 6])
    h4 = jnp.maximum(h2[0:TH + 3], h2[2:TH + 5])
    pooled = jnp.maximum(h4[0:TH], h4[3:TH + 3])

    # ---- squeeze 1x1 conv (+ folded BN) + ReLU ------------------------------
    # (TH, W, C) -> (TH*W, C): layout-friendly when W % 8 == 0 (sublanes).
    flat = pooled.reshape(TH * W, C).astype(jnp.bfloat16)
    z = jnp.dot(flat, w1_ref[...], preferred_element_type=jnp.float32)
    z = jnp.maximum(z + t1_ref[...], 0.0)

    # ---- unsqueeze 1x1 conv (+ folded BN) + exact sigmoid -------------------
    z = jnp.dot(z.astype(jnp.bfloat16), w2_ref[...],
                preferred_element_type=jnp.float32) + t2_ref[...]
    gate = (1.0 / (1.0 + jnp.exp(-z))).reshape(TH, W, C)

    # ---- channel-attention gating: y = gate * x -----------------------------
    # Raw x is the centre tap of the padded input; its last 3 rows live in the
    # halo block, hence the two-piece store (outer-axis slices, cheap).
    x_top = a_ref[0, 3:TH, 3:3 + W, :]          # output rows 0 .. TH-4
    x_bot = b_ref[0, 0:3, 3:3 + W, :]           # output rows TH-3 .. TH-1
    out_ref[0, 0:TH - 3] = (gate[0:TH - 3] * x_top).astype(out_ref.dtype)
    out_ref[0, TH - 3:TH] = (gate[TH - 3:TH] * x_bot).astype(out_ref.dtype)


def _round_up(v, m):
    return -(-v // m) * m


def _vmem_bytes(TH, W, C):
    """Estimated VMEM residency of one grid step: double-buffered main/halo/out
    blocks + rowmax scratch + slack for the (tiny) weights, lane/sublane padded."""
    lanes = _round_up(C, 128)
    a_b = TH * _round_up(W + 2 * _HALO, 8) * lanes * 4
    b_b = _HB * _round_up(W + 2 * _HALO, 8) * lanes * 4
    o_b = TH * _round_up(W, 8) * lanes * 4
    rm_b = (TH + 6) * _round_up(W, 8) * lanes * 4
    return 2 * (a_b + b_b + o_b) + rm_b + (1 << 20)


def _vmem_capacity_bytes():
    """Generation-aware VMEM capacity; conservative v7x (64 MiB) fallback."""
    try:
        cap = getattr(pltpu.get_tpu_info(), "vmem_capacity_bytes", None)
        if cap:
            return int(cap)
    except Exception:
        pass
    return 64 << 20


def _pick_tile_rows(H, W, C, budget):
    """Largest row tile (multiple of 8) whose FULL footprint fits the budget,
    with the main input block capped at ~8 MiB (diminishing returns beyond)."""
    h_cap = _round_up(H, _HB)
    lanes = _round_up(C, 128)
    best = _HB
    th = _HB
    while th <= h_cap:
        main = th * _round_up(W + 2 * _HALO, 8) * lanes * 4
        if _vmem_bytes(th, W, C) > budget or main > (8 << 20):
            break
        best = th
        th += _HB
    # prefer an exact divisor of H (avoids a trailing partial tile + final slice)
    for cand in range(best, _HB - 1, -_HB):
        if H % cand == 0:
            return cand
    return best


def _fold_params(params):
    """Fold conv bias + inference-mode BN into (bf16 weight, f32 shift)."""
    w1, b1, s1, t1, w2, b2, s2, t2 = params
    w1f = (w1 * s1).astype(jnp.bfloat16)           # (C, Cr)
    t1f = (b1 * s1 + t1).astype(jnp.float32)       # (1, Cr)
    w2f = (w2 * s2).astype(jnp.bfloat16)           # (Cr, C)
    t2f = (b2 * s2 + t2).astype(jnp.float32)       # (1, C)
    return w1f, t1f, w2f, t2f


def cam_forward(x_nchw, params):
    """CAM forward. x_nchw: (N, C, H, W) float32. Returns (N, C, H, W)."""
    w1f, t1f, w2f, t2f = _fold_params(params)

    # layout: NCHW -> NHWC (channels on the lane axis)
    x = jnp.transpose(x_nchw, (0, 2, 3, 1)).astype(jnp.float32)
    N, H, W, C = x.shape
    Cr = w1f.shape[1]

    cap = _vmem_capacity_bytes()
    budget = int(0.6 * cap)
    TH = _pick_tile_rows(H, W, C, budget)
    num_tiles = -(-H // TH)
    H_grid = num_tiles * TH

    # Single padded activation: 3-row/col -inf halo for the max-pool plus
    # bottom slack so the last tile's 8-row halo block stays in bounds.  The
    # kernel recovers raw x from the centre taps, so x itself is NOT passed
    # (halves activation read traffic vs shipping x AND xpad).
    xpad = jnp.pad(x, ((0, 0), (_HALO, H_grid + 5 - H), (_HALO, _HALO), (0, 0)),
                   constant_values=-jnp.inf)

    vmem_est = _vmem_bytes(TH, W, C)
    # Shape-driven limit with headroom; never clamped below the estimate.
    vmem_limit = int(min(max(int(1.25 * vmem_est), 24 << 20), cap))
    vmem_limit = max(vmem_limit, vmem_est)

    def _const(shape):
        return pl.BlockSpec(shape, lambda n, i: (0, 0))

    out = pl.pallas_call(
        _cam_kernel,
        out_shape=jax.ShapeDtypeStruct((N, H_grid, W, C), jnp.float32),
        grid_spec=pltpu.PrefetchScalarGridSpec(
            num_scalar_prefetch=0,
            grid=(N, num_tiles),
            in_specs=[
                # main row tile: padded rows [i*TH, i*TH+TH)
                # TODO(synk): if profiling shows exposed DMA when TH == 8
                # (wide-W shapes), add pipeline_mode=pl.Buffered(3) here.
                pl.BlockSpec((1, TH, W + 2 * _HALO, C),
                             lambda n, i: (n, i, 0, 0)),
                # bottom halo: 8 padded rows starting at (i+1)*TH
                pl.BlockSpec((1, _HB, W + 2 * _HALO, C),
                             lambda n, i: (n, (i + 1) * (TH // _HB), 0, 0)),
                _const((C, Cr)),
                _const((1, Cr)),
                _const((Cr, C)),
                _const((1, C)),
            ],
            out_specs=pl.BlockSpec((1, TH, W, C), lambda n, i: (n, i, 0, 0)),
            scratch_shapes=[pltpu.VMEM((TH + 6, W, C), jnp.float32)],
        ),
        # Both axes "parallel": megacore-shardable on v7x (no-op on v5e/v6e).
        compiler_params=pltpu.CompilerParams(
            dimension_semantics=("parallel", "parallel"),
            vmem_limit_bytes=vmem_limit),
    )(xpad, xpad, w1f, t1f, w2f, t2f)

    if H_grid != H:
        out = out[:, :H]
    return jnp.transpose(out, (0, 3, 1, 2))


def make_params(key, inplanes):
    """Deterministic synthetic parameters matching CAM.__init__ shapes."""
    Cr = inplanes // 16
    eps = 1e-5
    ks = jax.random.split(key, 10)

    # Conv2d(inplanes, Cr, 1): weight (Cr, C, 1, 1) -> matmul form (C, Cr)
    w1 = 0.1 * jax.random.normal(ks[0], (Cr, inplanes), jnp.float32)
    b1 = 0.1 * jax.random.normal(ks[1], (Cr,), jnp.float32)
    # Conv2d(Cr, inplanes, 1): weight (C, Cr, 1, 1) -> matmul form (Cr, C)
    w2 = 0.1 * jax.random.normal(ks[2], (inplanes, Cr), jnp.float32)
    b2 = 0.1 * jax.random.normal(ks[3], (inplanes,), jnp.float32)

    # BatchNorm params (inference mode: fold running stats to scale/shift)
    g1 = 1.0 + 0.1 * jax.random.normal(ks[4], (Cr,), jnp.float32)
    be1 = 0.1 * jax.random.normal(ks[5], (Cr,), jnp.float32)
    m1 = 0.1 * jax.random.normal(ks[6], (Cr,), jnp.float32)
    v1 = jnp.abs(1.0 + 0.1 * jax.random.normal(ks[7], (Cr,), jnp.float32))
    g2 = 1.0 + 0.1 * jax.random.normal(ks[8], (inplanes,), jnp.float32)
    be2 = 0.1 * jax.random.normal(ks[9], (inplanes,), jnp.float32)
    m2 = jnp.zeros((inplanes,), jnp.float32)
    v2 = jnp.ones((inplanes,), jnp.float32)

    s1 = g1 / jnp.sqrt(v1 + eps)
    t1 = be1 - m1 * s1
    s2 = g2 / jnp.sqrt(v2 + eps)
    t2 = be2 - m2 * s2

    return (w1.T, b1.reshape(1, Cr), s1.reshape(1, Cr), t1.reshape(1, Cr),
            w2.T, b2.reshape(1, inplanes), s2.reshape(1, inplanes),
            t2.reshape(1, inplanes))


def cam_reference(x_nchw, params):
    """Pure-JAX reference: inference-mode BN folding, bf16 MXU operand rounding
    identical to the kernel, exact sigmoid."""
    w1f, t1f, w2f, t2f = _fold_params(params)
    x = jnp.transpose(x_nchw, (0, 2, 3, 1)).astype(jnp.float32)
    N, H, W, C = x.shape
    xpad = jnp.pad(x, ((0, 0), (3, 3), (3, 3), (0, 0)),
                   constant_values=-jnp.inf)
    pooled = xpad[:, 3:3 + H, 3:3 + W, :]
    for dy in range(7):
        for dx in range(7):
            pooled = jnp.maximum(pooled, xpad[:, dy:dy + H, dx:dx + W, :])
    z = jnp.einsum('nhwc,cr->nhwr', pooled.astype(jnp.bfloat16), w1f,
                   preferred_element_type=jnp.float32) + t1f
    z = jnp.maximum(z, 0.0)
    z = jnp.einsum('nhwr,rc->nhwc', z.astype(jnp.bfloat16), w2f,
                   preferred_element_type=jnp.float32) + t2f
    gate = 1.0 / (1.0 + jnp.exp(-z))
    return jnp.transpose(gate * x, (0, 3, 1, 2))


if __name__ == "__main__":
    key = jax.random.PRNGKey(0)
    k_x, k_p = jax.random.split(key)

    N, C, H, W = 2, 32, 16, 16        # inplanes=32 so squeeze channels = 2
    x = jax.random.normal(k_x, (N, C, H, W), jnp.float32)
    params = make_params(k_p, C)

    out = jax.block_until_ready(cam_forward(x, params))
    ref = jax.block_until_ready(cam_reference(x, params))

    assert out.shape == (N, C, H, W)
    max_err = float(jnp.max(jnp.abs(out - ref)))
    assert jnp.allclose(out, ref, rtol=2e-3, atol=2e-3), \
        f"mismatch vs reference (max abs err {max_err})"

    print("KERNEL_OK")
</pallas_src>

<mosaic_0001>
module attributes {stable_mosaic.version = 11 : i64} {
  func.func @_cam_kernel(%arg0: i32, %arg1: i32, %arg2: memref<1x16x22x32xf32, #tpu.memory_space<vmem>>, %arg3: memref<1x8x22x32xf32, #tpu.memory_space<vmem>>, %arg4: memref<32x2xbf16, #tpu.memory_space<vmem>>, %arg5: memref<1x2xf32, #tpu.memory_space<vmem>>, %arg6: memref<2x32xbf16, #tpu.memory_space<vmem>>, %arg7: memref<1x32xf32, #tpu.memory_space<vmem>>, %arg8: memref<1x16x16x32xf32, #tpu.memory_space<vmem>>, %arg9: memref<22x16x32xf32, #tpu.memory_space<vmem>>) attributes {dimension_semantics = [#tpu.dimension_semantics<parallel>, #tpu.dimension_semantics<parallel>], iteration_bounds = array<i64: 2, 1>, scalar_prefetch = 0 : i64, scratch_operands = 1 : i64, tpu.core_type = #tpu.core_type<tc>, window_params = [{transform_indices = @transform_0, window_bounds = array<i64: 1, 16, 22, 32>}, {transform_indices = @transform_1, window_bounds = array<i64: 1, 8, 22, 32>}, {pipeline_mode = #tpu.pipeline_mode<synchronous>, transform_indices = @transform_2, window_bounds = array<i64: 32, 2>}, {pipeline_mode = #tpu.pipeline_mode<synchronous>, transform_indices = @transform_3, window_bounds = array<i64: 1, 2>}, {pipeline_mode = #tpu.pipeline_mode<synchronous>, transform_indices = @transform_4, window_bounds = array<i64: 2, 32>}, {pipeline_mode = #tpu.pipeline_mode<synchronous>, transform_indices = @transform_5, window_bounds = array<i64: 1, 32>}, {transform_indices = @transform_6, window_bounds = array<i64: 1, 16, 16, 32>}]} {
    %c0 = arith.constant 0 : index
    %c0_0 = arith.constant 0 : index
    %c0_1 = arith.constant 0 : index
    %c0_2 = arith.constant 0 : index
    %0 = vector.load %arg2[%c0, %c0_0, %c0_1, %c0_2] : memref<1x16x22x32xf32, #tpu.memory_space<vmem>>, vector<1x16x21x32xf32>
    %1 = vector.shape_cast %0 : vector<1x16x21x32xf32> to vector<16x21x32xf32>
    %c0_3 = arith.constant 0 : index
    %c0_4 = arith.constant 0 : index
    %c1 = arith.constant 1 : index
    %c0_5 = arith.constant 0 : index
    %2 = vector.load %arg2[%c0_3, %c0_4, %c1, %c0_5] : memref<1x16x22x32xf32, #tpu.memory_space<vmem>>, vector<1x16x21x32xf32>
    %3 = vector.shape_cast %2 : vector<1x16x21x32xf32> to vector<16x21x32xf32>
    %4 = arith.maximumf %1, %3 : vector<16x21x32xf32>
    %5 = vector.extract_strided_slice %4 {offsets = [0, 0, 0], sizes = [16, 19, 32], strides = [1, 1, 1]} : vector<16x21x32xf32> to vector<16x19x32xf32>
    %6 = vector.extract_strided_slice %4 {offsets = [0, 2, 0], sizes = [16, 19, 32], strides = [1, 1, 1]} : vector<16x21x32xf32> to vector<16x19x32xf32>
    %7 = arith.maximumf %5, %6 : vector<16x19x32xf32>
    %8 = vector.extract_strided_slice %7 {offsets = [0, 0, 0], sizes = [16, 16, 32], strides = [1, 1, 1]} : vector<16x19x32xf32> to vector<16x16x32xf32>
    %9 = vector.extract_strided_slice %7 {offsets = [0, 3, 0], sizes = [16, 16, 32], strides = [1, 1, 1]} : vector<16x19x32xf32> to vector<16x16x32xf32>
    %10 = arith.maximumf %8, %9 : vector<16x16x32xf32>
    %c0_6 = arith.constant 0 : index
    %c0_7 = arith.constant 0 : index
    %c0_8 = arith.constant 0 : index
    %11 = vector.load %arg9[%c0_6, %c0_7, %c0_8] : memref<22x16x32xf32, #tpu.memory_space<vmem>>, vector<16x16x32xf32>
    tpu.vector_store %arg9[%c0_6, %c0_7, %c0_8], %10 {strides = array<i32>} : memref<22x16x32xf32, #tpu.memory_space<vmem>>, vector<16x16x32xf32>,
    %c0_9 = arith.constant 0 : index
    %c0_10 = arith.constant 0 : index
    %c0_11 = arith.constant 0 : index
    %c0_12 = arith.constant 0 : index
    %12 = vector.load %arg3[%c0_9, %c0_10, %c0_11, %c0_12] : memref<1x8x22x32xf32, #tpu.memory_space<vmem>>, vector<1x6x21x32xf32>
    %13 = vector.shape_cast %12 : vector<1x6x21x32xf32> to vector<6x21x32xf32>
    %c0_13 = arith.constant 0 : index
    %c0_14 = arith.constant 0 : index
    %c1_15 = arith.constant 1 : index
    %c0_16 = arith.constant 0 : index
    %14 = vector.load %arg3[%c0_13, %c0_14, %c1_15, %c0_16] : memref<1x8x22x32xf32, #tpu.memory_space<vmem>>, vector<1x6x21x32xf32>
    %15 = vector.shape_cast %14 : vector<1x6x21x32xf32> to vector<6x21x32xf32>
    %16 = arith.maximumf %13, %15 : vector<6x21x32xf32>
    %17 = vector.extract_strided_slice %16 {offsets = [0, 0, 0], sizes = [6, 19, 32], strides = [1, 1, 1]} : vector<6x21x32xf32> to vector<6x19x32xf32>
    %18 = vector.extract_strided_slice %16 {offsets = [0, 2, 0], sizes = [6, 19, 32], strides = [1, 1, 1]} : vector<6x21x32xf32> to vector<6x19x32xf32>
    %19 = arith.maximumf %17, %18 : vector<6x19x32xf32>
    %20 = vector.extract_strided_slice %19 {offsets = [0, 0, 0], sizes = [6, 16, 32], strides = [1, 1, 1]} : vector<6x19x32xf32> to vector<6x16x32xf32>
    %21 = vector.extract_strided_slice %19 {offsets = [0, 3, 0], sizes = [6, 16, 32], strides = [1, 1, 1]} : vector<6x19x32xf32> to vector<6x16x32xf32>
    %22 = arith.maximumf %20, %21 : vector<6x16x32xf32>
    %c16 = arith.constant 16 : index
    %c0_17 = arith.constant 0 : index
    %c0_18 = arith.constant 0 : index
    %23 = vector.load %arg9[%c16, %c0_17, %c0_18] : memref<22x16x32xf32, #tpu.memory_space<vmem>>, vector<6x16x32xf32>
    tpu.vector_store %arg9[%c16, %c0_17, %c0_18], %22 {strides = array<i32>} : memref<22x16x32xf32, #tpu.memory_space<vmem>>, vector<6x16x32xf32>,
    %c0_19 = arith.constant 0 : index
    %c0_20 = arith.constant 0 : index
    %c0_21 = arith.constant 0 : index
    %24 = vector.load %arg9[%c0_19, %c0_20, %c0_21] : memref<22x16x32xf32, #tpu.memory_space<vmem>>, vector<21x16x32xf32>
    %c1_22 = arith.constant 1 : index
    %c0_23 = arith.constant 0 : index
    %c0_24 = arith.constant 0 : index
    %25 = vector.load %arg9[%c1_22, %c0_23, %c0_24] : memref<22x16x32xf32, #tpu.memory_space<vmem>>, vector<21x16x32xf32>
    %26 = arith.maximumf %24, %25 : vector<21x16x32xf32>
    %27 = vector.extract_strided_slice %26 {offsets = [0, 0, 0], sizes = [19, 16, 32], strides = [1, 1, 1]} : vector<21x16x32xf32> to vector<19x16x32xf32>
    %28 = vector.extract_strided_slice %26 {offsets = [2, 0, 0], sizes = [19, 16, 32], strides = [1, 1, 1]} : vector<21x16x32xf32> to vector<19x16x32xf32>
    %29 = arith.maximumf %27, %28 : vector<19x16x32xf32>
    %30 = vector.extract_strided_slice %29 {offsets = [0, 0, 0], sizes = [16, 16, 32], strides = [1, 1, 1]} : vector<19x16x32xf32> to vector<16x16x32xf32>
    %31 = vector.extract_strided_slice %29 {offsets = [3, 0, 0], sizes = [16, 16, 32], strides = [1, 1, 1]} : vector<19x16x32xf32> to vector<16x16x32xf32>
    %32 = arith.maximumf %30, %31 : vector<16x16x32xf32>
    %33 = vector.shape_cast %32 : vector<16x16x32xf32> to vector<256x32xf32>
    %34 = arith.truncf %33 : vector<256x32xf32> to vector<256x32xbf16>
    %c0_25 = arith.constant 0 : index
    %c0_26 = arith.constant 0 : index
    %35 = vector.load %arg4[%c0_25, %c0_26] : memref<32x2xbf16, #tpu.memory_space<vmem>>, vector<32x2xbf16>
    %cst = arith.constant dense<0.000000e+00> : vector<256x2xf32>
    %36 = tpu.matmul %34, %35, %cst {dimension_numbers = #tpu.dot_dimension_numbers<[1], [0], [0], [1], [0, 0, 1, 1], [], []>} : vector<256x32xbf16>, vector<32x2xbf16>, vector<256x2xf32> -> vector<256x2xf32>
    %c0_27 = arith.constant 0 : index
    %c0_28 = arith.constant 0 : index
    %37 = vector.load %arg5[%c0_27, %c0_28] : memref<1x2xf32, #tpu.memory_space<vmem>>, vector<1x2xf32>
    %38 = vector.broadcast %37 : vector<1x2xf32> to vector<256x2xf32>
    %39 = arith.addf %36, %38 : vector<256x2xf32>
    %cst_29 = arith.constant 0.000000e+00 : f32
    %40 = vector.broadcast %cst_29 : f32 to vector<256x2xf32>
    %41 = arith.maximumf %39, %40 : vector<256x2xf32>
    %42 = arith.truncf %41 : vector<256x2xf32> to vector<256x2xbf16>
    %c0_30 = arith.constant 0 : index
    %c0_31 = arith.constant 0 : index
    %43 = vector.load %arg6[%c0_30, %c0_31] : memref<2x32xbf16, #tpu.memory_space<vmem>>, vector<2x32xbf16>
    %cst_32 = arith.constant dense<0.000000e+00> : vector<256x32xf32>
    %44 = tpu.matmul %42, %43, %cst_32 {dimension_numbers = #tpu.dot_dimension_numbers<[1], [0], [0], [1], [0, 0, 1, 1], [], []>} : vector<256x2xbf16>, vector<2x32xbf16>, vector<256x32xf32> -> vector<256x32xf32>
    %c0_33 = arith.constant 0 : index
    %c0_34 = arith.constant 0 : index
    %45 = vector.load %arg7[%c0_33, %c0_34] : memref<1x32xf32, #tpu.memory_space<vmem>>, vector<1x32xf32>
    %46 = vector.broadcast %45 : vector<1x32xf32> to vector<256x32xf32>
    %47 = arith.addf %44, %46 : vector<256x32xf32>
    %cst_35 = arith.constant 0.000000e+00 : f32
    %48 = vector.broadcast %cst_35 : f32 to vector<256x32xf32>
    %49 = arith.subf %48, %47 : vector<256x32xf32>
    %50 = math.exp %49 : vector<256x32xf32>
    %cst_36 = arith.constant 1.000000e+00 : f32
    %51 = vector.broadcast %cst_36 : f32 to vector<256x32xf32>
    %52 = arith.addf %51, %50 : vector<256x32xf32>
    %cst_37 = arith.constant 1.000000e+00 : f32
    %53 = vector.broadcast %cst_37 : f32 to vector<256x32xf32>
    %54 = arith.divf %53, %52 : vector<256x32xf32>
    %55 = vector.shape_cast %54 : vector<256x32xf32> to vector<16x16x32xf32>
    %c0_38 = arith.constant 0 : index
    %c3 = arith.constant 3 : index
    %c3_39 = arith.constant 3 : index
    %c0_40 = arith.constant 0 : index
    %56 = vector.load %arg2[%c0_38, %c3, %c3_39, %c0_40] : memref<1x16x22x32xf32, #tpu.memory_space<vmem>>, vector<1x13x16x32xf32>
    %57 = vector.shape_cast %56 : vector<1x13x16x32xf32> to vector<13x16x32xf32>
    %c0_41 = arith.constant 0 : index
    %c0_42 = arith.constant 0 : index
    %c3_43 = arith.constant 3 : index
    %c0_44 = arith.constant 0 : index
    %58 = vector.load %arg3[%c0_41, %c0_42, %c3_43, %c0_44] : memref<1x8x22x32xf32, #tpu.memory_space<vmem>>, vector<1x3x16x32xf32>
    %59 = vector.shape_cast %58 : vector<1x3x16x32xf32> to vector<3x16x32xf32>
    %60 = vector.extract_strided_slice %55 {offsets = [0, 0, 0], sizes = [13, 16, 32], strides = [1, 1, 1]} : vector<16x16x32xf32> to vector<13x16x32xf32>
    %61 = arith.mulf %60, %57 : vector<13x16x32xf32>
    %c0_45 = arith.constant 0 : index
    %c0_46 = arith.constant 0 : index
    %c0_47 = arith.constant 0 : index
    %c0_48 = arith.constant 0 : index
    %62 = vector.load %arg8[%c0_45, %c0_46, %c0_47, %c0_48] : memref<1x16x16x32xf32, #tpu.memory_space<vmem>>, vector<1x13x16x32xf32>
    %63 = vector.shape_cast %62 : vector<1x13x16x32xf32> to vector<13x16x32xf32>
    %64 = vector.shape_cast %61 : vector<13x16x32xf32> to vector<1x13x16x32xf32>
    tpu.vector_store %arg8[%c0_45, %c0_46, %c0_47, %c0_48], %64 {strides = array<i32>} : memref<1x16x16x32xf32, #tpu.memory_space<vmem>>, vector<1x13x16x32xf32>,
    %65 = vector.extract_strided_slice %55 {offsets = [13, 0, 0], sizes = [3, 16, 32], strides = [1, 1, 1]} : vector<16x16x32xf32> to vector<3x16x32xf32>
    %66 = arith.mulf %65, %59 : vector<3x16x32xf32>
    %c0_49 = arith.constant 0 : index
    %c13 = arith.constant 13 : index
    %c0_50 = arith.constant 0 : index
    %c0_51 = arith.constant 0 : index
    %67 = vector.load %arg8[%c0_49, %c13, %c0_50, %c0_51] : memref<1x16x16x32xf32, #tpu.memory_space<vmem>>, vector<1x3x16x32xf32>
    %68 = vector.shape_cast %67 : vector<1x3x16x32xf32> to vector<3x16x32xf32>
    %69 = vector.shape_cast %66 : vector<3x16x32xf32> to vector<1x3x16x32xf32>
    tpu.vector_store %arg8[%c0_49, %c13, %c0_50, %c0_51], %69 {strides = array<i32>} : memref<1x16x16x32xf32, #tpu.memory_space<vmem>>, vector<1x3x16x32xf32>,
    return
  }
  func.func @transform_0(%arg0: i32, %arg1: i32) -> (i32, i32, i32, i32) {
    %c0_i32 = arith.constant 0 : i32
    %c0_i32_0 = arith.constant 0 : i32
    %c0_i32_1 = arith.constant 0 : i32
    return %arg0, %arg1, %c0_i32, %c0_i32_0 : i32, i32, i32, i32
  }
  func.func @transform_1(%arg0: i32, %arg1: i32) -> (i32, i32, i32, i32) {
    %c1_i32 = arith.constant 1 : i32
    %0 = arith.addi %arg1, %c1_i32 : i32
    %c2_i32 = arith.constant 2 : i32
    %1 = arith.muli %0, %c2_i32 : i32
    %c0_i32 = arith.constant 0 : i32
    %c0_i32_0 = arith.constant 0 : i32
    %c0_i32_1 = arith.constant 0 : i32
    return %arg0, %1, %c0_i32, %c0_i32_0 : i32, i32, i32, i32
  }
  func.func @transform_2(%arg0: i32, %arg1: i32) -> (i32, i32) {
    %c0_i32 = arith.constant 0 : i32
    %c0_i32_0 = arith.constant 0 : i32
    %c0_i32_1 = arith.constant 0 : i32
    return %c0_i32, %c0_i32_0 : i32, i32
  }
  func.func @transform_3(%arg0: i32, %arg1: i32) -> (i32, i32) {
    %c0_i32 = arith.constant 0 : i32
    %c0_i32_0 = arith.constant 0 : i32
    %c0_i32_1 = arith.constant 0 : i32
    return %c0_i32, %c0_i32_0 : i32, i32
  }
  func.func @transform_4(%arg0: i32, %arg1: i32) -> (i32, i32) {
    %c0_i32 = arith.constant 0 : i32
    %c0_i32_0 = arith.constant 0 : i32
    %c0_i32_1 = arith.constant 0 : i32
    return %c0_i32, %c0_i32_0 : i32, i32
  }
  func.func @transform_5(%arg0: i32, %arg1: i32) -> (i32, i32) {
    %c0_i32 = arith.constant 0 : i32
    %c0_i32_0 = arith.constant 0 : i32
    %c0_i32_1 = arith.constant 0 : i32
    return %c0_i32, %c0_i32_0 : i32, i32
  }
  func.func @transform_6(%arg0: i32, %arg1: i32) -> (i32, i32, i32, i32) {
    %c0_i32 = arith.constant 0 : i32
    %c0_i32_0 = arith.constant 0 : i32
    %c0_i32_1 = arith.constant 0 : i32
    return %arg0, %arg1, %c0_i32, %c0_i32_0 : i32, i32, i32, i32
  }
}

</mosaic_0001>

<llo_original>
// kernel: tpu_custom_call.1
$region0: #{tpu_custom_call.1}
  #allocation0 [shape = 'u32[]', space=smem, size = 0x4, offset = 0x4, fixed_abs, tag = 'smem constant byte address 0x4 - core index']
  #allocation1 [shape = 'u32[72,128]{1,0:T(1,128)}', space=vmem, size = 0x9000, scoped, tag = 'internal scratch']
  #allocation2 [shape = 'f32[22,16,32]{2,1,0:T(8,128)}', space=vmem, size = 0x2c000, scoped, tag = 'scratch operand']
  %s0 = inlined_call_operand.vmem [shape: f32[2,24,22,32], index: 0, kind: input, shape index: {}]
  %s1 = inlined_call_operand.vmem [shape: f32[2,24,22,32], index: 1, kind: input, shape index: {}]
  %s2 = inlined_call_operand.vmem [shape: bf16[32,2], index: 2, kind: input, shape index: {}]
  %s3 = inlined_call_operand.vmem [shape: f32[1,2], index: 3, kind: input, shape index: {}]
  %s4 = inlined_call_operand.vmem [shape: bf16[2,32], index: 4, kind: input, shape index: {}]
  %s5 = inlined_call_operand.vmem [shape: f32[1,32], index: 5, kind: input, shape index: {}]
  %s6 = inlined_call_operand.hbm [shape: f32[2,16,16,32], index: 6, kind: output, shape index: {}]
  %s7 = sld [smem:[#allocation0]]
  $region57: #{tpu_custom_call.1} parent=0
    _
  %s9 = ssub.s32 1, %s7
  %s10 = scalar_select 0, %s9, %s7
  $region1: #{tpu_custom_call.1} parent=0
    #allocation3 [shape = 'u8[262144]{0}', space=vmem, size = 0x40000, scoped, tag = 'output window, operand 0']
    #allocation4 [shape = 's32[2]{0}', space=sflag, size = 0x8, scoped, tag = 'scoped memory for tpu_custom_call.1']
    %11 = vsyncpa [#allocation4], 0
    %s12 = scalar_lea.sflag [#allocation4], 1
    %13 = vsyncpa %s12, 0
    loop: start=0, step=1, limit=4
    $region2: #{tpu_custom_call.1} parent=1 // loop_pre_header
      _
    $region3: #{tpu_custom_call.1} parent=1 // loop_header
      %s15 = sphi 0, %s19
      %p16 = scmp.ge.s32.totalorder %s15, 4
      %s22 = sphi 0, %s34
      %s23 = sphi 0, %s30
      %s24 = sphi 0, %s22
      %s25 = sphi 0, %s23
      %s26 = sphi 0, %s24
      %s27 = sphi 0, %s25
      %s39 = sphi 0, %s41
      %s42 = sphi 0, %s39
      %s43 = sphi 0, %s42
      %s59 = sphi 0, %s43
      %s71 = sphi 0, %s73
      %s74 = sphi 0, %s71
      %s75 = sphi 0, %s74
      %s91 = sphi 0, %s75
      %s95 = sphi 0, %s95
      %s97 = sphi 0, %s95
      %s98 = sphi 0, %s97
      %s112 = sphi 0, %s98
      %s116 = sphi 0, %s116
      %s118 = sphi 0, %s116
      %s119 = sphi 0, %s118
      %s133 = sphi 0, %s119
      %s137 = sphi 0, %s137
      %s139 = sphi 0, %s137
      %s140 = sphi 0, %s139
      %s154 = sphi 0, %s140
      %s158 = sphi 0, %s158
      %s160 = sphi 0, %s158
      %s161 = sphi 0, %s160
      %s175 = sphi 0, %s161
      %s183 = sphi 0, %s185
      %s186 = sphi 0, %s183
      %s187 = sphi 0, %s186
      %s203 = sphi 0, %s187
    $region4: #{tpu_custom_call.1} parent=1 // loop_header_branch
      %18 = sbr.rel (%p16) target = $region8
    $region5: #{tpu_custom_call.1} parent=1 // loop_body
      %s20 = ssub.s32 %s15, 1
      %s21 = ssub.s32 %s15, 2
      %s28 = sadd.s32 1, %s23
      %p29 = scmp.ge.s32.totalorder %s28, 1
      %s30 = scalar_select %p29, 0, %s28
      %s31 = sadd.s32 1, %s22
      %s32 = scalar_select %p29, %s31, %s22
      %p33 = scmp.ge.s32.totalorder %s32, 2
      %s34 = scalar_select %p33, 0, %s32
      %s35 = ssub.s32 %s22, %s34
      %s36 = ssub.s32 %s23, %s30
      %s37 = sor.u32 %s35, %s36
      %p38 = scmp.eq.s32.totalorder %s37, 0
      %s40 = sadd.s32 %s39, 1
      %s41 = scalar_select %p38, %s39, %s40
      %p44 = pneg %p38
      %p45 = scmp.eq.s32.totalorder %s15, 1
      %p46 = por %p44, %p45
      %p47 = scmp.ne.s32.totalorder %s39, %s42
      %p48 = scmp.eq.s32.totalorder %s15, 0
      %p49 = por %p47, %p48
      %p50 = scmp.ne.s32.totalorder %s39, %s42
      %p51 = scmp.eq.s32.totalorder %s20, 1
      %p52 = por %p50, %p51
      %p53 = scmp.ne.s32.totalorder %s42, %s43
      %p54 = scmp.eq.s32.totalorder %s20, 0
      %p55 = por %p53, %p54
      %p56 = scmp.ne.s32.totalorder %s42, %s43
      %p57 = scmp.eq.s32.totalorder %s21, 1
      %p58 = por %p56, %p57
      %p60 = scmp.ne.s32.totalorder %s43, %s59
      %p61 = scmp.eq.s32.totalorder %s21, 0
      %p62 = por %p60, %p61
      %s63 = sadd.s32 %s23, 1
      %s64 = smul.u32 %s63, 2
      %s65 = sadd.s32 %s30, 1
      %s66 = smul.u32 %s65, 2
      %s67 = ssub.s32 %s22, %s34
      %s68 = ssub.s32 %s64, %s66
      %s69 = sor.u32 %s67, %s68
      %p70 = scmp.eq.s32.totalorder %s69, 0
      %s72 = sadd.s32 %s71, 1
      %s73 = scalar_select %p70, %s71, %s72
      %p76 = pneg %p70
      %p77 = scmp.eq.s32.totalorder %s15, 1
      %p78 = por %p76, %p77
      %p79 = scmp.ne.s32.totalorder %s71, %s74
      %p80 = scmp.eq.s32.totalorder %s15, 0
      %p81 = por %p79, %p80
      %p82 = scmp.ne.s32.totalorder %s71, %s74
      %p83 = scmp.eq.s32.totalorder %s20, 1
      %p84 = por %p82, %p83
      %p85 = scmp.ne.s32.totalorder %s74, %s75
      %p86 = scmp.eq.s32.totalorder %s20, 0
      %p87 = por %p85, %p86
      %p88 = scmp.ne.s32.totalorder %s74, %s75
      %p89 = scmp.eq.s32.totalorder %s21, 1
      %p90 = por %p88, %p89
      %p92 = scmp.ne.s32.totalorder %s75, %s91
      %p93 = scmp.eq.s32.totalorder %s21, 0
      %p94 = por %p92, %p93
      %s96 = sadd.s32 %s95, 1
      %p99 = scmp.eq.s32.totalorder %s15, 1
      %p100 = scmp.ne.s32.totalorder %s95, %s97
      %p101 = scmp.eq.s32.totalorder %s15, 0
      %p102 = por %p100, %p101
      %p103 = scmp.ne.s32.totalorder %s95, %s97
      %p104 = scmp.eq.s32.totalorder %s20, 1
      %p105 = por %p103, %p104
      %p106 = scmp.ne.s32.totalorder %s97, %s98
      %p107 = scmp.eq.s32.totalorder %s20, 0
      %p108 = por %p106, %p107
      %p109 = scmp.ne.s32.totalorder %s97, %s98
      %p110 = scmp.eq.s32.totalorder %s21, 1
      %p111 = por %p109, %p110
      %p113 = scmp.ne.s32.totalorder %s98, %s112
      %p114 = scmp.eq.s32.totalorder %s21, 0
      %p115 = por %p113, %p114
      %s117 = sadd.s32 %s116, 1
      %p120 = scmp.eq.s32.totalorder %s15, 1
      %p121 = scmp.ne.s32.totalorder %s116, %s118
      %p122 = scmp.eq.s32.totalorder %s15, 0
      %p123 = por %p121, %p122
      %p124 = scmp.ne.s32.totalorder %s116, %s118
      %p125 = scmp.eq.s32.totalorder %s20, 1
      %p126 = por %p124, %p125
      %p127 = scmp.ne.s32.totalorder %s118, %s119
      %p128 = scmp.eq.s32.totalorder %s20, 0
      %p129 = por %p127, %p128
      %p130 = scmp.ne.s32.totalorder %s118, %s119
      %p131 = scmp.eq.s32.totalorder %s21, 1
      %p132 = por %p130, %p131
      %p134 = scmp.ne.s32.totalorder %s119, %s133
      %p135 = scmp.eq.s32.totalorder %s21, 0
      %p136 = por %p134, %p135
      %s138 = sadd.s32 %s137, 1
      %p141 = scmp.eq.s32.totalorder %s15, 1
      %p142 = scmp.ne.s32.totalorder %s137, %s139
      %p143 = scmp.eq.s32.totalorder %s15, 0
      %p144 = por %p142, %p143
      %p145 = scmp.ne.s32.totalorder %s137, %s139
      %p146 = scmp.eq.s32.totalorder %s20, 1
      %p147 = por %p145, %p146
      %p148 = scmp.ne.s32.totalorder %s139, %s140
      %p149 = scmp.eq.s32.totalorder %s20, 0
      %p150 = por %p148, %p149
      %p151 = scmp.ne.s32.totalorder %s139, %s140
      %p152 = scmp.eq.s32.totalorder %s21, 1
      %p153 = por %p151, %p152
      %p155 = scmp.ne.s32.totalorder %s140, %s154
      %p156 = scmp.eq.s32.totalorder %s21, 0
      %p157 = por %p155, %p156
      %s159 = sadd.s32 %s158, 1
      %p162 = scmp.eq.s32.totalorder %s15, 1
      %p163 = scmp.ne.s32.totalorder %s158, %s160
      %p164 = scmp.eq.s32.totalorder %s15, 0
      %p165 = por %p163, %p164
      %p166 = scmp.ne.s32.totalorder %s158, %s160
      %p167 = scmp.eq.s32.totalorder %s20, 1
      %p168 = por %p166, %p167
      %p169 = scmp.ne.s32.totalorder %s160, %s161
      %p170 = scmp.eq.s32.totalorder %s20, 0
      %p171 = por %p169, %p170
      %p172 = scmp.ne.s32.totalorder %s160, %s161
      %p173 = scmp.eq.s32.totalorder %s21, 1
      %p174 = por %p172, %p173
      %p176 = scmp.ne.s32.totalorder %s161, %s175
      %p177 = scmp.eq.s32.totalorder %s21, 0
      %p178 = por %p176, %p177
      %s179 = ssub.s32 %s22, %s34
      %s180 = ssub.s32 %s23, %s30
      %s181 = sor.u32 %s179, %s180
      %p182 = scmp.eq.s32.totalorder %s181, 0
      %s184 = sadd.s32 %s183, 1
      %s185 = scalar_select %p182, %s183, %s184
      %p188 = pneg %p182
      %p189 = scmp.eq.s32.totalorder %s15, 1
      %p190 = por %p188, %p189
      %p191 = scmp.ne.s32.totalorder %s183, %s186
      %p192 = scmp.eq.s32.totalorder %s15, 0
      %p193 = por %p191, %p192
      %p194 = scmp.ne.s32.totalorder %s183, %s186
      %p195 = scmp.eq.s32.totalorder %s20, 1
      %p196 = por %p194, %p195
      %p197 = scmp.ne.s32.totalorder %s186, %s187
      %p198 = scmp.eq.s32.totalorder %s20, 0
      %p199 = por %p197, %p198
      %p200 = scmp.ne.s32.totalorder %s186, %s187
      %p201 = scmp.eq.s32.totalorder %s21, 1
      %p202 = por %p200, %p201
      %p204 = scmp.ne.s32.totalorder %s187, %s203
      %p205 = scmp.eq.s32.totalorder %s21, 0
      %p206 = por %p204, %p205
      %p207 = scmp.le.s32.totalorder 1, %s15
      %p208 = scmp.lt.s32.totalorder %s15, 3
      %p209 = pnand %p207, %p208
      %p210 = pneg %p209
      // Predicated region
      $region9: #{tpu_custom_call.1} parent=5 // pred_check
        _
      $region10: #{tpu_custom_call.1} parent=5 // pred_check_branch
        %212 = sbr.rel (%p209) target = $region12
      $region11: #{tpu_custom_call.1} parent=5 // pred_region
        %s213 = ssub.s32 %s15, 1
        // Predicated region
        $region13: #{tpu_custom_call.1} parent=11 // pred_check
          %p214 = pneg %p108
        $region14: #{tpu_custom_call.1} parent=11 // pred_check_branch
          %216 = sbr.rel (%p214) target = $region16
        $region15: #{tpu_custom_call.1} parent=11 // pred_region
          _
        $region16: #{tpu_custom_call.1} parent=11 // pred_fallthru
          _
        // Predicated region
        $region17: #{tpu_custom_call.1} parent=11 // pred_check
          %p217 = pneg %p129
        $region18: #{tpu_custom_call.1} parent=11 // pred_check_branch
          %219 = sbr.rel (%p217) target = $region20
        $region19: #{tpu_custom_call.1} parent=11 // pred_region
          _
        $region20: #{tpu_custom_call.1} parent=11 // pred_fallthru
          _
        // Predicated region
        $region21: #{tpu_custom_call.1} parent=11 // pred_check
          %p220 = pneg %p150
        $region22: #{tpu_custom_call.1} parent=11 // pred_check_branch
          %222 = sbr.rel (%p220) target = $region24
        $region23: #{tpu_custom_call.1} parent=11 // pred_region
          _
        $region24: #{tpu_custom_call.1} parent=11 // pred_fallthru
          _
        // Predicated region
        $region25: #{tpu_custom_call.1} parent=11 // pred_check
          %p223 = pneg %p171
        $region26: #{tpu_custom_call.1} parent=11 // pred_check_branch
          %225 = sbr.rel (%p223) target = $region28
        $region27: #{tpu_custom_call.1} parent=11 // pred_region
          _
        $region28: #{tpu_custom_call.1} parent=11 // pred_fallthru
          _
      $region12: #{tpu_custom_call.1} parent=5 // pred_fallthru
        _
      %p226 = scmp.lt.s32.totalorder %s15, 2
      // Predicated region
      $region29: #{tpu_custom_call.1} parent=5 // pred_check
        %p227 = pneg %p226
      $region30: #{tpu_custom_call.1} parent=5 // pred_check_branch
        %229 = sbr.rel (%p227) target = $region32
      $region31: #{tpu_custom_call.1} parent=5 // pred_region
        // Predicated region
        $region33: #{tpu_custom_call.1} parent=31 // pred_check
          %p230 = pneg %p49
        $region34: #{tpu_custom_call.1} parent=31 // pred_check_branch
          %232 = sbr.rel (%p230) target = $region36
        $region35: #{tpu_custom_call.1} parent=31 // pred_region
          %s233 = smul.u32 16, %s23
          %s234 = ssub.s32 24, %s233
          %p235 = scmp.lt.s32.totalorder %s234, 16
          %s236 = scalar_select %p235, %s234, 16
          %s237 = smul.u32 8, %s236
          %s238 = smul.u32 %s237, 3
          %p239 = scmp.lt.s32.totalorder %s22, 1
          %s240 = scalar_select %p239, %s22, 1
          %p241 = scmp.lt.s32.totalorder %s233, 23
          %s242 = scalar_select %p241, %s233, 23
          %s243 = smul.addr %s242, 3
          %s244 = smul.addr %s240, 72
          %s245 = sadd.s32 %s243, %s244
          %s246 = smul.addr %s245, 8
          %s247 = scalar_lea.vmem %s0, %s246
          %s248 = smul.u32 16, %s23
          %s249 = ssub.s32 24, %s248
          %p250 = scmp.lt.s32.totalorder %s249, 16
          %s251 = scalar_select %p250, %s249, 16
          %s252 = smul.u32 8, %s251
          %s253 = smul.u32 %s252, 3
        $region36: #{tpu_custom_call.1} parent=31 // pred_fallthru
          _
        // Predicated region
        $region37: #{tpu_custom_call.1} parent=31 // pred_check
          %p254 = pneg %p81
        $region38: #{tpu_custom_call.1} parent=31 // pred_check_branch
          %256 = sbr.rel (%p254) target = $region40
        $region39: #{tpu_custom_call.1} parent=31 // pred_region
          %s257 = sadd.s32 %s23, 1
          %s258 = smul.u32 %s257, 2
          %s259 = smul.u32 8, %s258
          %p260 = scmp.lt.s32.totalorder %s22, 1
          %s261 = scalar_select %p260, %s22, 1
          %p262 = scmp.lt.s32.totalorder %s259, 23
          %s263 = scalar_select %p262, %s259, 23
          %s264 = smul.addr %s263, 3
          %s265 = smul.addr %s261, 72
          %s266 = sadd.s32 %s264, %s265
          %s267 = smul.addr %s266, 8
          %s268 = scalar_lea.vmem %s1, %s267
          %s269 = sadd.s32 %s23, 1
          %s270 = smul.u32 %s269, 2
          %s271 = smul.u32 8, %s270
        $region40: #{tpu_custom_call.1} parent=31 // pred_fallthru
          _
      $region32: #{tpu_custom_call.1} parent=5 // pred_fallthru
        _
      %p272 = scmp.le.s32.totalorder 1, %s15
      %p273 = scmp.lt.s32.totalorder %s15, 3
      %p274 = pnand %p272, %p273
      %p275 = pneg %p274
      // Predicated region
      $region41: #{tpu_custom_call.1} parent=5 // pred_check
        _
      $region42: #{tpu_custom_call.1} parent=5 // pred_check_branch
        %277 = sbr.rel (%p274) target = $region44
      $region43: #{tpu_custom_call.1} parent=5 // pred_region
        %s278 = ssub.s32 %s15, 1
        %s279 = smul.u32 16, %s25
        %s280 = ssub.s32 24, %s279
        %p281 = scmp.lt.s32.totalorder %s280, 16
        %s282 = scalar_select %p281, %s280, 16
        %s283 = smul.u32 8, %s282
        %s284 = smul.u32 %s283, 3
        %p285 = scmp.lt.s32.totalorder %s24, 1
        %s286 = scalar_select %p285, %s24, 1
        %p287 = scmp.lt.s32.totalorder %s279, 23
        %s288 = scalar_select %p287, %s279, 23
        %s289 = smul.addr %s288, 3
        %s290 = smul.addr %s286, 72
        %s291 = sadd.s32 %s289, %s290
        %s292 = smul.addr %s291, 8
        %s293 = scalar_lea.vmem %s0, %s292
        %p294 = pneg %p55
        %p295 = pneg %p52
        %s296 = sadd.s32 %s25, 1
        %s297 = smul.u32 %s296, 2
        %s298 = smul.u32 8, %s297
        %p299 = scmp.lt.s32.totalorder %s24, 1
        %s300 = scalar_select %p299, %s24, 1
        %p301 = scmp.lt.s32.totalorder %s298, 23
        %s302 = scalar_select %p301, %s298, 23
        %s303 = smul.addr %s302, 3
        %s304 = smul.addr %s300, 72
        %s305 = sadd.s32 %s303, %s304
        %s306 = smul.addr %s305, 8
        %s307 = scalar_lea.vmem %s1, %s306
        %p308 = pneg %p87
        %p309 = pneg %p84
        %p310 = pneg %p108
        %p311 = pneg %p105
        %p312 = pneg %p129
        %p313 = pneg %p126
        %p314 = pneg %p150
        %p315 = pneg %p147
        %p316 = pneg %p171
        %p317 = pneg %p168
        %p318 = pneg %p199
        %p319 = pneg %p196
        %s320 = sand.u32 %s186, 1
        %s321 = scalar_lea.sflag [#allocation4], %s320
        %s322 = sand.u32 %s186, 1
        %s323 = smul.addr %s322, 256
        %s324 = scalar_lea.vmem [#allocation3], %s323
        %s325 = smul.u32 16, %s25
        %s326 = ssub.s32 24, %s325
        %p327 = scmp.lt.s32.totalorder %s326, 16
        %s328 = scalar_select %p327, %s326, 16
        %s329 = smul.u32 8, %s328
        %s330 = smul.u32 %s329, 3
        %p331 = scmp.lt.s32.totalorder %s24, 1
        %s332 = scalar_select %p331, %s24, 1
        %p333 = scmp.lt.s32.totalorder %s325, 23
        %s334 = scalar_select %p333, %s325, 23
        %s335 = smul.addr %s334, 3
        %s336 = smul.addr %s332, 72
        %s337 = sadd.s32 %s335, %s336
        %s338 = smul.addr %s337, 8
        %s339 = scalar_lea.vmem %s0, %s338
        %s340 = smul.u32 16, %s25
        %s341 = ssub.s32 24, %s340
        %p342 = scmp.lt.s32.totalorder %s341, 16
        %s343 = scalar_select %p342, %s341, 16
        %s344 = smul.u32 8, %s343
        %s345 = smul.u32 %s344, 3
        %s346 = sadd.s32 %s25, 1
        %s347 = smul.u32 %s346, 2
        %s348 = smul.u32 8, %s347
        %p349 = scmp.lt.s32.totalorder %s24, 1
        %s350 = scalar_select %p349, %s24, 1
        %p351 = scmp.lt.s32.totalorder %s348, 23
        %s352 = scalar_select %p351, %s348, 23
        %s353 = smul.addr %s352, 3
        %s354 = smul.addr %s350, 72
        %s355 = sadd.s32 %s353, %s354
        %s356 = smul.addr %s355, 8
        %s357 = scalar_lea.vmem %s1, %s356
        %s358 = sadd.s32 %s25, 1
        %s359 = smul.u32 %s358, 2
        %s360 = smul.u32 8, %s359
        %s361 = smul.u32 16, %s25
        %v363 = vld [vmem:[%s339] sm:$0xff]
        %v364 = vld [vmem:[%s339 + $0x8] sm:$0xff]
        %v365 = vld [vmem:[%s339 + $0x10] sm:$0x1f]
        %v366 = vld [vmem:[%s339 + $0x18] sm:$0xff]
        %v367 = vld [vmem:[%s339 + $0x20] sm:$0xff]
        %v368 = vld [vmem:[%s339 + $0x28] sm:$0x1f]
        %v369 = vld [vmem:[%s339 + $0x30] sm:$0xff]
        %v370 = vld [vmem:[%s339 + $0x38] sm:$0xff]
        %v371 = vld [vmem:[%s339 + $0x40] sm:$0x1f]
        %v372 = vld [vmem:[%s339 + $0x48] sm:$0xff]
        %v373 = vld [vmem:[%s339 + $0x50] sm:$0xff]
        %v374 = vld [vmem:[%s339 + $0x58] sm:$0x1f]
        %v375 = vld [vmem:[%s339 + $0x60] sm:$0xff]
        %v376 = vld [vmem:[%s339 + $0x68] sm:$0xff]
        %v377 = vld [vmem:[%s339 + $0x70] sm:$0x1f]
        %v378 = vld [vmem:[%s339 + $0x78] sm:$0xff]
        %v379 = vld [vmem:[%s339 + $0x80] sm:$0xff]
        %v380 = vld [vmem:[%s339 + $0x88] sm:$0x1f]
        %v381 = vld [vmem:[%s339 + $0x90] sm:$0xff]
        %v382 = vld [vmem:[%s339 + $0x98] sm:$0xff]
        %v383 = vld [vmem:[%s339 + $0xa0] sm:$0x1f]
        %v384 = vld [vmem:[%s339 + $0xa8] sm:$0xff]
        %v385 = vld [vmem:[%s339 + $0xb0] sm:$0xff]
        %v386 = vld [vmem:[%s339 + $0xb8] sm:$0x1f]
        %v387 = vld [vmem:[%s339 + $0xc0] sm:$0xff]
        %v388 = vld [vmem:[%s339 + $0xc8] sm:$0xff]
        %v389 = vld [vmem:[%s339 + $0xd0] sm:$0x1f]
        %v390 = vld [vmem:[%s339 + $0xd8] sm:$0xff]
        %v391 = vld [vmem:[%s339 + $0xe0] sm:$0xff]
        %v392 = vld [vmem:[%s339 + $0xe8] sm:$0x1f]
        %v393 = vld [vmem:[%s339 + $0xf0] sm:$0xff]
        %v394 = vld [vmem:[%s339 + $0xf8] sm:$0xff]
        %v395 = vld [vmem:[%s339 + $0x100] sm:$0x1f]
        %v396 = vld [vmem:[%s339 + $0x108] sm:$0xff]
        %v397 = vld [vmem:[%s339 + $0x110] sm:$0xff]
        %v398 = vld [vmem:[%s339 + $0x118] sm:$0x1f]
        %v399 = vld [vmem:[%s339 + $0x120] sm:$0xff]
        %v400 = vld [vmem:[%s339 + $0x128] sm:$0xff]
        %v401 = vld [vmem:[%s339 + $0x130] sm:$0x1f]
        %v402 = vld [vmem:[%s339 + $0x138] sm:$0xff]
        %v403 = vld [vmem:[%s339 + $0x140] sm:$0xff]
        %v404 = vld [vmem:[%s339 + $0x148] sm:$0x1f]
        %v405 = vld [vmem:[%s339 + $0x150] sm:$0xff]
        %v406 = vld [vmem:[%s339 + $0x158] sm:$0xff]
        %v407 = vld [vmem:[%s339 + $0x160] sm:$0x1f]
        %v408 = vld [vmem:[%s339 + $0x168] sm:$0xff]
        %v409 = vld [vmem:[%s339 + $0x170] sm:$0xff]
        %v410 = vld [vmem:[%s339 + $0x178] sm:$0x1f]
        %v411 = vld [vmem:[%s339 + $0x1] sm:$0xff]
        %v412 = vld [vmem:[%s339 + $0x9] sm:$0xff]
        %v413 = vld [vmem:[%s339 + $0x11] sm:$0x1f]
        %v414 = vld [vmem:[%s339 + $0x19] sm:$0xff]
        %v415 = vld [vmem:[%s339 + $0x21] sm:$0xff]
        %v416 = vld [vmem:[%s339 + $0x29] sm:$0x1f]
        %v417 = vld [vmem:[%s339 + $0x31] sm:$0xff]
        %v418 = vld [vmem:[%s339 + $0x39] sm:$0xff]
        %v419 = vld [vmem:[%s339 + $0x41] sm:$0x1f]
        %v420 = vld [vmem:[%s339 + $0x49] sm:$0xff]
        %v421 = vld [vmem:[%s339 + $0x51] sm:$0xff]
        %v422 = vld [vmem:[%s339 + $0x59] sm:$0x1f]
        %v423 = vld [vmem:[%s339 + $0x61] sm:$0xff]
        %v424 = vld [vmem:[%s339 + $0x69] sm:$0xff]
        %v425 = vld [vmem:[%s339 + $0x71] sm:$0x1f]
        %v426 = vld [vmem:[%s339 + $0x79] sm:$0xff]
        %v427 = vld [vmem:[%s339 + $0x81] sm:$0xff]
        %v428 = vld [vmem:[%s339 + $0x89] sm:$0x1f]
        %v429 = vld [vmem:[%s339 + $0x91] sm:$0xff]
        %v430 = vld [vmem:[%s339 + $0x99] sm:$0xff]
        %v431 = vld [vmem:[%s339 + $0xa1] sm:$0x1f]
        %v432 = vld [vmem:[%s339 + $0xa9] sm:$0xff]
        %v433 = vld [vmem:[%s339 + $0xb1] sm:$0xff]
        %v434 = vld [vmem:[%s339 + $0xb9] sm:$0x1f]
        %v435 = vld [vmem:[%s339 + $0xc1] sm:$0xff]
        %v436 = vld [vmem:[%s339 + $0xc9] sm:$0xff]
        %v437 = vld [vmem:[%s339 + $0xd1] sm:$0x1f]
        %v438 = vld [vmem:[%s339 + $0xd9] sm:$0xff]
        %v439 = vld [vmem:[%s339 + $0xe1] sm:$0xff]
        %v440 = vld [vmem:[%s339 + $0xe9] sm:$0x1f]
        %v441 = vld [vmem:[%s339 + $0xf1] sm:$0xff]
        %v442 = vld [vmem:[%s339 + $0xf9] sm:$0xff]
        %v443 = vld [vmem:[%s339 + $0x101] sm:$0x1f]
        %v444 = vld [vmem:[%s339 + $0x109] sm:$0xff]
        %v445 = vld [vmem:[%s339 + $0x111] sm:$0xff]
        %v446 = vld [vmem:[%s339 + $0x119] sm:$0x1f]
        %v447 = vld [vmem:[%s339 + $0x121] sm:$0xff]
        %v448 = vld [vmem:[%s339 + $0x129] sm:$0xff]
        %v449 = vld [vmem:[%s339 + $0x131] sm:$0x1f]
        %v450 = vld [vmem:[%s339 + $0x139] sm:$0xff]
        %v451 = vld [vmem:[%s339 + $0x141] sm:$0xff]
        %v452 = vld [vmem:[%s339 + $0x149] sm:$0x1f]
        %v453 = vld [vmem:[%s339 + $0x151] sm:$0xff]
        %v454 = vld [vmem:[%s339 + $0x159] sm:$0xff]
        %v455 = vld [vmem:[%s339 + $0x161] sm:$0x1f]
        %v456 = vld [vmem:[%s339 + $0x169] sm:$0xff]
        %v457 = vld [vmem:[%s339 + $0x171] sm:$0xff]
        %v458 = vld [vmem:[%s339 + $0x179] sm:$0x1f]
        %v459 = vmax.f32 %v363, %v411
        %v460 = vmax.f32 %v364, %v412
        %v461 = vmax.f32 %v365, %v413
        %v462 = vmax.f32 %v366, %v414
        %v463 = vmax.f32 %v367, %v415
        %v464 = vmax.f32 %v368, %v416
        %v465 = vmax.f32 %v369, %v417
        %v466 = vmax.f32 %v370, %v418
        %v467 = vmax.f32 %v371, %v419
        %v468 = vmax.f32 %v372, %v420
        %v469 = vmax.f32 %v373, %v421
        %v470 = vmax.f32 %v374, %v422
        %v471 = vmax.f32 %v375, %v423
        %v472 = vmax.f32 %v376, %v424
        %v473 = vmax.f32 %v377, %v425
        %v474 = vmax.f32 %v378, %v426
        %v475 = vmax.f32 %v379, %v427
        %v476 = vmax.f32 %v380, %v428
        %v477 = vmax.f32 %v381, %v429
        %v478 = vmax.f32 %v382, %v430
        %v479 = vmax.f32 %v383, %v431
        %v480 = vmax.f32 %v384, %v432
        %v481 = vmax.f32 %v385, %v433
        %v482 = vmax.f32 %v386, %v434
        %v483 = vmax.f32 %v387, %v435
        %v484 = vmax.f32 %v388, %v436
        %v485 = vmax.f32 %v389, %v437
        %v486 = vmax.f32 %v390, %v438
        %v487 = vmax.f32 %v391, %v439
        %v488 = vmax.f32 %v392, %v440
        %v489 = vmax.f32 %v393, %v441
        %v490 = vmax.f32 %v394, %v442
        %v491 = vmax.f32 %v395, %v443
        %v492 = vmax.f32 %v396, %v444
        %v493 = vmax.f32 %v397, %v445
        %v494 = vmax.f32 %v398, %v446
        %v495 = vmax.f32 %v399, %v447
        %v496 = vmax.f32 %v400, %v448
        %v497 = vmax.f32 %v401, %v449
        %v498 = vmax.f32 %v402, %v450
        %v499 = vmax.f32 %v403, %v451
        %v500 = vmax.f32 %v404, %v452
        %v501 = vmax.f32 %v405, %v453
        %v502 = vmax.f32 %v406, %v454
        %v503 = vmax.f32 %v407, %v455
        %v504 = vmax.f32 %v408, %v456
        %v505 = vmax.f32 %v409, %v457
        %v506 = vmax.f32 %v410, %v458
        %vm555 = vcmask 1045504
        %v556 = vrot.slane %v459, 2
        %v557 = vrot.slane %v460, 2
        %v558 = vsel %vm555, %v556, %v557
        %v559 = vrot.slane %v461, 2
        %v560 = vsel %vm555, %v557, %v559
        %v561 = vrot.slane %v462, 2
        %v562 = vrot.slane %v463, 2
        %v563 = vsel %vm555, %v561, %v562
        %v564 = vrot.slane %v464, 2
        %v565 = vsel %vm555, %v562, %v564
        %v566 = vrot.slane %v465, 2
        %v567 = vrot.slane %v466, 2
        %v568 = vsel %vm555, %v566, %v567
        %v569 = vrot.slane %v467, 2
        %v570 = vsel %vm555, %v567, %v569
        %v571 = vrot.slane %v468, 2
        %v572 = vrot.slane %v469, 2
        %v573 = vsel %vm555, %v571, %v572
        %v574 = vrot.slane %v470, 2
        %v575 = vsel %vm555, %v572, %v574
        %v576 = vrot.slane %v471, 2
        %v577 = vrot.slane %v472, 2
        %v578 = vsel %vm555, %v576, %v577
        %v579 = vrot.slane %v473, 2
        %v580 = vsel %vm555, %v577, %v579
        %v581 = vrot.slane %v474, 2
        %v582 = vrot.slane %v475, 2
        %v583 = vsel %vm555, %v581, %v582
        %v584 = vrot.slane %v476, 2
        %v585 = vsel %vm555, %v582, %v584
        %v586 = vrot.slane %v477, 2
        %v587 = vrot.slane %v478, 2
        %v588 = vsel %vm555, %v586, %v587
        %v589 = vrot.slane %v479, 2
        %v590 = vsel %vm555, %v587, %v589
        %v591 = vrot.slane %v480, 2
        %v592 = vrot.slane %v481, 2
        %v593 = vsel %vm555, %v591, %v592
        %v594 = vrot.slane %v482, 2
        %v595 = vsel %vm555, %v592, %v594
        %v596 = vrot.slane %v483, 2
        %v597 = vrot.slane %v484, 2
        %v598 = vsel %vm555, %v596, %v597
        %v599 = vrot.slane %v485, 2
        %v600 = vsel %vm555, %v597, %v599
        %v601 = vrot.slane %v486, 2
        %v602 = vrot.slane %v487, 2
        %v603 = vsel %vm555, %v601, %v602
        %v604 = vrot.slane %v488, 2
        %v605 = vsel %vm555, %v602, %v604
        %v606 = vrot.slane %v489, 2
        %v607 = vrot.slane %v490, 2
        %v608 = vsel %vm555, %v606, %v607
        %v609 = vrot.slane %v491, 2
        %v610 = vsel %vm555, %v607, %v609
        %v611 = vrot.slane %v492, 2
        %v612 = vrot.slane %v493, 2
        %v613 = vsel %vm555, %v611, %v612
        %v614 = vrot.slane %v494, 2
        %v615 = vsel %vm555, %v612, %v614
        %v616 = vrot.slane %v495, 2
        %v617 = vrot.slane %v496, 2
        %v618 = vsel %vm555, %v616, %v617
        %v619 = vrot.slane %v497, 2
        %v620 = vsel %vm555, %v617, %v619
        %v621 = vrot.slane %v498, 2
        %v622 = vrot.slane %v499, 2
        %v623 = vsel %vm555, %v621, %v622
        %v624 = vrot.slane %v500, 2
        %v625 = vsel %vm555, %v622, %v624
        %v626 = vrot.slane %v501, 2
        %v627 = vrot.slane %v502, 2
        %v628 = vsel %vm555, %v626, %v627
        %v629 = vrot.slane %v503, 2
        %v630 = vsel %vm555, %v627, %v629
        %v631 = vrot.slane %v504, 2
        %v632 = vrot.slane %v505, 2
        %v633 = vsel %vm555, %v631, %v632
        %v634 = vrot.slane %v506, 2
        %v635 = vsel %vm555, %v632, %v634
        %v684 = vmax.f32 %v459, %v558
        %v685 = vmax.f32 %v460, %v560
        %v686 = vmax.f32 %v461, %v559
        %v687 = vmax.f32 %v462, %v563
        %v688 = vmax.f32 %v463, %v565
        %v689 = vmax.f32 %v464, %v564
        %v690 = vmax.f32 %v465, %v568
        %v691 = vmax.f32 %v466, %v570
        %v692 = vmax.f32 %v467, %v569
        %v693 = vmax.f32 %v468, %v573
        %v694 = vmax.f32 %v469, %v575
        %v695 = vmax.f32 %v470, %v574
        %v696 = vmax.f32 %v471, %v578
        %v697 = vmax.f32 %v472, %v580
        %v698 = vmax.f32 %v473, %v579
        %v699 = vmax.f32 %v474, %v583
        %v700 = vmax.f32 %v475, %v585
        %v701 = vmax.f32 %v476, %v584
        %v702 = vmax.f32 %v477, %v588
        %v703 = vmax.f32 %v478, %v590
        %v704 = vmax.f32 %v479, %v589
        %v705 = vmax.f32 %v480, %v593
        %v706 = vmax.f32 %v481, %v595
        %v707 = vmax.f32 %v482, %v594
        %v708 = vmax.f32 %v483, %v598
        %v709 = vmax.f32 %v484, %v600
        %v710 = vmax.f32 %v485, %v599
        %v711 = vmax.f32 %v486, %v603
        %v712 = vmax.f32 %v487, %v605
        %v713 = vmax.f32 %v488, %v604
        %v714 = vmax.f32 %v489, %v608
        %v715 = vmax.f32 %v490, %v610
        %v716 = vmax.f32 %v491, %v609
        %v717 = vmax.f32 %v492, %v613
        %v718 = vmax.f32 %v493, %v615
        %v719 = vmax.f32 %v494, %v614
        %v720 = vmax.f32 %v495, %v618
        %v721 = vmax.f32 %v496, %v620
        %v722 = vmax.f32 %v497, %v619
        %v723 = vmax.f32 %v498, %v623
        %v724 = vmax.f32 %v499, %v625
        %v725 = vmax.f32 %v500, %v624
        %v726 = vmax.f32 %v501, %v628
        %v727 = vmax.f32 %v502, %v630
        %v728 = vmax.f32 %v503, %v629
        %v729 = vmax.f32 %v504, %v633
        %v730 = vmax.f32 %v505, %v635
        %v731 = vmax.f32 %v506, %v634
        %vm780 = vcmask 1044480
        %v781 = vrot.slane %v684, 3
        %v782 = vrot.slane %v685, 3
        %v783 = vsel %vm780, %v781, %v782
        %v784 = vrot.slane %v686, 3
        %v785 = vsel %vm780, %v782, %v784
        %v786 = vrot.slane %v687, 3
        %v787 = vrot.slane %v688, 3
        %v788 = vsel %vm780, %v786, %v787
        %v789 = vrot.slane %v689, 3
        %v790 = vsel %vm780, %v787, %v789
        %v791 = vrot.slane %v690, 3
        %v792 = vrot.slane %v691, 3
        %v793 = vsel %vm780, %v791, %v792
        %v794 = vrot.slane %v692, 3
        %v795 = vsel %vm780, %v792, %v794
        %v796 = vrot.slane %v693, 3
        %v797 = vrot.slane %v694, 3
        %v798 = vsel %vm780, %v796, %v797
        %v799 = vrot.slane %v695, 3
        %v800 = vsel %vm780, %v797, %v799
        %v801 = vrot.slane %v696, 3
        %v802 = vrot.slane %v697, 3
        %v803 = vsel %vm780, %v801, %v802
        %v804 = vrot.slane %v698, 3
        %v805 = vsel %vm780, %v802, %v804
        %v806 = vrot.slane %v699, 3
        %v807 = vrot.slane %v700, 3
        %v808 = vsel %vm780, %v806, %v807
        %v809 = vrot.slane %v701, 3
        %v810 = vsel %vm780, %v807, %v809
        %v811 = vrot.slane %v702, 3
        %v812 = vrot.slane %v703, 3
        %v813 = vsel %vm780, %v811, %v812
        %v814 = vrot.slane %v704, 3
        %v815 = vsel %vm780, %v812, %v814
        %v816 = vrot.slane %v705, 3
        %v817 = vrot.slane %v706, 3
        %v818 = vsel %vm780, %v816, %v817
        %v819 = vrot.slane %v707, 3
        %v820 = vsel %vm780, %v817, %v819
        %v821 = vrot.slane %v708, 3
        %v822 = vrot.slane %v709, 3
        %v823 = vsel %vm780, %v821, %v822
        %v824 = vrot.slane %v710, 3
        %v825 = vsel %vm780, %v822, %v824
        %v826 = vrot.slane %v711, 3
        %v827 = vrot.slane %v712, 3
        %v828 = vsel %vm780, %v826, %v827
        %v829 = vrot.slane %v713, 3
        %v830 = vsel %vm780, %v827, %v829
        %v831 = vrot.slane %v714, 3
        %v832 = vrot.slane %v715, 3
        %v833 = vsel %vm780, %v831, %v832
        %v834 = vrot.slane %v716, 3
        %v835 = vsel %vm780, %v832, %v834
        %v836 = vrot.slane %v717, 3
        %v837 = vrot.slane %v718, 3
        %v838 = vsel %vm780, %v836, %v837
        %v839 = vrot.slane %v719, 3
        %v840 = vsel %vm780, %v837, %v839
        %v841 = vrot.slane %v720, 3
        %v842 = vrot.slane %v721, 3
        %v843 = vsel %vm780, %v841, %v842
        %v844 = vrot.slane %v722, 3
        %v845 = vsel %vm780, %v842, %v844
        %v846 = vrot.slane %v723, 3
        %v847 = vrot.slane %v724, 3
        %v848 = vsel %vm780, %v846, %v847
        %v849 = vrot.slane %v725, 3
        %v850 = vsel %vm780, %v847, %v849
        %v851 = vrot.slane %v726, 3
        %v852 = vrot.slane %v727, 3
        %v853 = vsel %vm780, %v851, %v852
        %v854 = vrot.slane %v728, 3
        %v855 = vsel %vm780, %v852, %v854
        %v856 = vrot.slane %v729, 3
        %v857 = vrot.slane %v730, 3
        %v858 = vsel %vm780, %v856, %v857
        %v859 = vrot.slane %v731, 3
        %v860 = vsel %vm780, %v857, %v859
        %v893 = vmax.f32 %v684, %v783
        %v894 = vmax.f32 %v685, %v785
        %v895 = vmax.f32 %v687, %v788
        %v896 = vmax.f32 %v688, %v790
        %v897 = vmax.f32 %v690, %v793
        %v898 = vmax.f32 %v691, %v795
        %v899 = vmax.f32 %v693, %v798
        %v900 = vmax.f32 %v694, %v800
        %v901 = vmax.f32 %v696, %v803
        %v902 = vmax.f32 %v697, %v805
        %v903 = vmax.f32 %v699, %v808
        %v904 = vmax.f32 %v700, %v810
        %v905 = vmax.f32 %v702, %v813
        %v906 = vmax.f32 %v703, %v815
        %v907 = vmax.f32 %v705, %v818
        %v908 = vmax.f32 %v706, %v820
        %v909 = vmax.f32 %v708, %v823
        %v910 = vmax.f32 %v709, %v825
        %v911 = vmax.f32 %v711, %v828
        %v912 = vmax.f32 %v712, %v830
        %v913 = vmax.f32 %v714, %v833
        %v914 = vmax.f32 %v715, %v835
        %v915 = vmax.f32 %v717, %v838
        %v916 = vmax.f32 %v718, %v840
        %v917 = vmax.f32 %v720, %v843
        %v918 = vmax.f32 %v721, %v845
        %v919 = vmax.f32 %v723, %v848
        %v920 = vmax.f32 %v724, %v850
        %v921 = vmax.f32 %v726, %v853
        %v922 = vmax.f32 %v727, %v855
        %v923 = vmax.f32 %v729, %v858
        %v924 = vmax.f32 %v730, %v860
        %vm925 = vcmask 261120
        %926 = vst.msk [vmem:[#allocation2] sm:$0xff] %vm925, %v893
        %927 = vst.msk [vmem:[#allocation2 + $0x8] sm:$0xff] %vm925, %v894
        %928 = vst.msk [vmem:[#allocation2 + $0x10] sm:$0xff] %vm925, %v895
        %929 = vst.msk [vmem:[#allocation2 + $0x18] sm:$0xff] %vm925, %v896
        %930 = vst.msk [vmem:[#allocation2 + $0x20] sm:$0xff] %vm925, %v897
        %931 = vst.msk [vmem:[#allocation2 + $0x28] sm:$0xff] %vm925, %v898
        %932 = vst.msk [vmem:[#allocation2 + $0x30] sm:$0xff] %vm925, %v899
        %933 = vst.msk [vmem:[#allocation2 + $0x38] sm:$0xff] %vm925, %v900
        %934 = vst.msk [vmem:[#allocation2 + $0x40] sm:$0xff] %vm925, %v901
        %935 = vst.msk [vmem:[#allocation2 + $0x48] sm:$0xff] %vm925, %v902
        %936 = vst.msk [vmem:[#allocation2 + $0x50] sm:$0xff] %vm925, %v903
        %937 = vst.msk [vmem:[#allocation2 + $0x58] sm:$0xff] %vm925, %v904
        %938 = vst.msk [vmem:[#allocation2 + $0x60] sm:$0xff] %vm925, %v905
        %939 = vst.msk [vmem:[#allocation2 + $0x68] sm:$0xff] %vm925, %v906
        %940 = vst.msk [vmem:[#allocation2 + $0x70] sm:$0xff] %vm925, %v907
        %941 = vst.msk [vmem:[#allocation2 + $0x78] sm:$0xff] %vm925, %v908
        %942 = vst.msk [vmem:[#allocation2 + $0x80] sm:$0xff] %vm925, %v909
        %943 = vst.msk [vmem:[#allocation2 + $0x88] sm:$0xff] %vm925, %v910
        %944 = vst.msk [vmem:[#allocation2 + $0x90] sm:$0xff] %vm925, %v911
        %945 = vst.msk [vmem:[#allocation2 + $0x98] sm:$0xff] %vm925, %v912
        %946 = vst.msk [vmem:[#allocation2 + $0xa0] sm:$0xff] %vm925, %v913
        %947 = vst.msk [vmem:[#allocation2 + $0xa8] sm:$0xff] %vm925, %v914
        %948 = vst.msk [vmem:[#allocation2 + $0xb0] sm:$0xff] %vm925, %v915
        %949 = vst.msk [vmem:[#allocation2 + $0xb8] sm:$0xff] %vm925, %v916
        %950 = vst.msk [vmem:[#allocation2 + $0xc0] sm:$0xff] %vm925, %v917
        %951 = vst.msk [vmem:[#allocation2 + $0xc8] sm:$0xff] %vm925, %v918
        %952 = vst.msk [vmem:[#allocation2 + $0xd0] sm:$0xff] %vm925, %v919
        %953 = vst.msk [vmem:[#allocation2 + $0xd8] sm:$0xff] %vm925, %v920
        %954 = vst.msk [vmem:[#allocation2 + $0xe0] sm:$0xff] %vm925, %v921
        %955 = vst.msk [vmem:[#allocation2 + $0xe8] sm:$0xff] %vm925, %v922
        %956 = vst.msk [vmem:[#allocation2 + $0xf0] sm:$0xff] %vm925, %v923
        %957 = vst.msk [vmem:[#allocation2 + $0xf8] sm:$0xff] %vm925, %v924
        %v958 = vld [vmem:[%s357] sm:$0xff]
        %v959 = vld [vmem:[%s357 + $0x8] sm:$0xff]
        %v960 = vld [vmem:[%s357 + $0x10] sm:$0x1f]
        %v961 = vld [vmem:[%s357 + $0x18] sm:$0xff]
        %v962 = vld [vmem:[%s357 + $0x20] sm:$0xff]
        %v963 = vld [vmem:[%s357 + $0x28] sm:$0x1f]
        %v964 = vld [vmem:[%s357 + $0x30] sm:$0xff]
        %v965 = vld [vmem:[%s357 + $0x38] sm:$0xff]
        %v966 = vld [vmem:[%s357 + $0x40] sm:$0x1f]
        %v967 = vld [vmem:[%s357 + $0x48] sm:$0xff]
        %v968 = vld [vmem:[%s357 + $0x50] sm:$0xff]
        %v969 = vld [vmem:[%s357 + $0x58] sm:$0x1f]
        %v970 = vld [vmem:[%s357 + $0x60] sm:$0xff]
        %v971 = vld [vmem:[%s357 + $0x68] sm:$0xff]
        %v972 = vld [vmem:[%s357 + $0x70] sm:$0x1f]
        %v973 = vld [vmem:[%s357 + $0x78] sm:$0xff]
        %v974 = vld [vmem:[%s357 + $0x80] sm:$0xff]
        %v975 = vld [vmem:[%s357 + $0x88] sm:$0x1f]
        %v976 = vld [vmem:[%s357 + $0x1] sm:$0xff]
        %v977 = vld [vmem:[%s357 + $0x9] sm:$0xff]
        %v978 = vld [vmem:[%s357 + $0x11] sm:$0x1f]
        %v979 = vld [vmem:[%s357 + $0x19] sm:$0xff]
        %v980 = vld [vmem:[%s357 + $0x21] sm:$0xff]
        %v981 = vld [vmem:[%s357 + $0x29] sm:$0x1f]
        %v982 = vld [vmem:[%s357 + $0x31] sm:$0xff]
        %v983 = vld [vmem:[%s357 + $0x39] sm:$0xff]
        %v984 = vld [vmem:[%s357 + $0x41] sm:$0x1f]
        %v985 = vld [vmem:[%s357 + $0x49] sm:$0xff]
        %v986 = vld [vmem:[%s357 + $0x51] sm:$0xff]
        %v987 = vld [vmem:[%s357 + $0x59] sm:$0x1f]
        %v988 = vld [vmem:[%s357 + $0x61] sm:$0xff]
        %v989 = vld [vmem:[%s357 + $0x69] sm:$0xff]
        %v990 = vld [vmem:[%s357 + $0x71] sm:$0x1f]
        %v991 = vld [vmem:[%s357 + $0x79] sm:$0xff]
        %v992 = vld [vmem:[%s357 + $0x81] sm:$0xff]
        %v993 = vld [vmem:[%s357 + $0x89] sm:$0x1f]
        %v994 = vmax.f32 %v958, %v976
        %v995 = vmax.f32 %v959, %v977
        %v996 = vmax.f32 %v960, %v978
        %v997 = vmax.f32 %v961, %v979
        %v998 = vmax.f32 %v962, %v980
        %v999 = vmax.f32 %v963, %v981
        %v1000 = vmax.f32 %v964, %v982
        %v1001 = vmax.f32 %v965, %v983
        %v1002 = vmax.f32 %v966, %v984
        %v1003 = vmax.f32 %v967, %v985
        %v1004 = vmax.f32 %v968, %v986
        %v1005 = vmax.f32 %v969, %v987
        %v1006 = vmax.f32 %v970, %v988
        %v1007 = vmax.f32 %v971, %v989
        %v1008 = vmax.f32 %v972, %v990
        %v1009 = vmax.f32 %v973, %v991
        %v1010 = vmax.f32 %v974, %v992
        %v1011 = vmax.f32 %v975, %v993
        %v1030 = vrot.slane %v994, 2
        %v1031 = vrot.slane %v995, 2
        %v1032 = vsel %vm555, %v1030, %v1031
        %v1033 = vrot.slane %v996, 2
        %v1034 = vsel %vm555, %v1031, %v1033
        %v1035 = vrot.slane %v997, 2
        %v1036 = vrot.slane %v998, 2
        %v1037 = vsel %vm555, %v1035, %v1036
        %v1038 = vrot.slane %v999, 2
        %v1039 = vsel %vm555, %v1036, %v1038
        %v1040 = vrot.slane %v1000, 2
        %v1041 = vrot.slane %v1001, 2
        %v1042 = vsel %vm555, %v1040, %v1041
        %v1043 = vrot.slane %v1002, 2
        %v1044 = vsel %vm555, %v1041, %v1043
        %v1045 = vrot.slane %v1003, 2
        %v1046 = vrot.slane %v1004, 2
        %v1047 = vsel %vm555, %v1045, %v1046
        %v1048 = vrot.slane %v1005, 2
        %v1049 = vsel %vm555, %v1046, %v1048
        %v1050 = vrot.slane %v1006, 2
        %v1051 = vrot.slane %v1007, 2
        %v1052 = vsel %vm555, %v1050, %v1051
        %v1053 = vrot.slane %v1008, 2
        %v1054 = vsel %vm555, %v1051, %v1053
        %v1055 = vrot.slane %v1009, 2
        %v1056 = vrot.slane %v1010, 2
        %v1057 = vsel %vm555, %v1055, %v1056
        %v1058 = vrot.slane %v1011, 2
        %v1059 = vsel %vm555, %v1056, %v1058
        %v1078 = vmax.f32 %v994, %v1032
        %v1079 = vmax.f32 %v995, %v1034
        %v1080 = vmax.f32 %v996, %v1033
        %v1081 = vmax.f32 %v997, %v1037
        %v1082 = vmax.f32 %v998, %v1039
        %v1083 = vmax.f32 %v999, %v1038
        %v1084 = vmax.f32 %v1000, %v1042
        %v1085 = vmax.f32 %v1001, %v1044
        %v1086 = vmax.f32 %v1002, %v1043
        %v1087 = vmax.f32 %v1003, %v1047
        %v1088 = vmax.f32 %v1004, %v1049
        %v1089 = vmax.f32 %v1005, %v1048
        %v1090 = vmax.f32 %v1006, %v1052
        %v1091 = vmax.f32 %v1007, %v1054
        %v1092 = vmax.f32 %v1008, %v1053
        %v1093 = vmax.f32 %v1009, %v1057
        %v1094 = vmax.f32 %v1010, %v1059
        %v1095 = vmax.f32 %v1011, %v1058
        %v1114 = vrot.slane %v1078, 3
        %v1115 = vrot.slane %v1079, 3
        %v1116 = vsel %vm780, %v1114, %v1115
        %v1117 = vrot.slane %v1080, 3
        %v1118 = vsel %vm780, %v1115, %v1117
        %v1119 = vrot.slane %v1081, 3
        %v1120 = vrot.slane %v1082, 3
        %v1121 = vsel %vm780, %v1119, %v1120
        %v1122 = vrot.slane %v1083, 3
        %v1123 = vsel %vm780, %v1120, %v1122
        %v1124 = vrot.slane %v1084, 3
        %v1125 = vrot.slane %v1085, 3
        %v1126 = vsel %vm780, %v1124, %v1125
        %v1127 = vrot.slane %v1086, 3
        %v1128 = vsel %vm780, %v1125, %v1127
        %v1129 = vrot.slane %v1087, 3
        %v1130 = vrot.slane %v1088, 3
        %v1131 = vsel %vm780, %v1129, %v1130
        %v1132 = vrot.slane %v1089, 3
        %v1133 = vsel %vm780, %v1130, %v1132
        %v1134 = vrot.slane %v1090, 3
        %v1135 = vrot.slane %v1091, 3
        %v1136 = vsel %vm780, %v1134, %v1135
        %v1137 = vrot.slane %v1092, 3
        %v1138 = vsel %vm780, %v1135, %v1137
        %v1139 = vrot.slane %v1093, 3
        %v1140 = vrot.slane %v1094, 3
        %v1141 = vsel %vm780, %v1139, %v1140
        %v1142 = vrot.slane %v1095, 3
        %v1143 = vsel %vm780, %v1140, %v1142
        %v1156 = vmax.f32 %v1078, %v1116
        %v1157 = vmax.f32 %v1079, %v1118
        %v1158 = vmax.f32 %v1081, %v1121
        %v1159 = vmax.f32 %v1082, %v1123
        %v1160 = vmax.f32 %v1084, %v1126
        %v1161 = vmax.f32 %v1085, %v1128
        %v1162 = vmax.f32 %v1087, %v1131
        %v1163 = vmax.f32 %v1088, %v1133
        %v1164 = vmax.f32 %v1090, %v1136
        %v1165 = vmax.f32 %v1091, %v1138
        %v1166 = vmax.f32 %v1093, %v1141
        %v1167 = vmax.f32 %v1094, %v1143
        %s1168 = scalar_lea.vmem [#allocation2], 256
        %1169 = vst.msk [vmem:[%s1168] sm:$0xff] %vm925, %v1156
        %1170 = vst.msk [vmem:[%s1168 + $0x8] sm:$0xff] %vm925, %v1157
        %1171 = vst.msk [vmem:[%s1168 + $0x10] sm:$0xff] %vm925, %v1158
        %1172 = vst.msk [vmem:[%s1168 + $0x18] sm:$0xff] %vm925, %v1159
        %1173 = vst.msk [vmem:[%s1168 + $0x20] sm:$0xff] %vm925, %v1160
        %1174 = vst.msk [vmem:[%s1168 + $0x28] sm:$0xff] %vm925, %v1161
        %1175 = vst.msk [vmem:[%s1168 + $0x30] sm:$0xff] %vm925, %v1162
        %1176 = vst.msk [vmem:[%s1168 + $0x38] sm:$0xff] %vm925, %v1163
        %1177 = vst.msk [vmem:[%s1168 + $0x40] sm:$0xff] %vm925, %v1164
        %1178 = vst.msk [vmem:[%s1168 + $0x48] sm:$0xff] %vm925, %v1165
        %1179 = vst.msk [vmem:[%s1168 + $0x50] sm:$0xff] %vm925, %v1166
        %1180 = vst.msk [vmem:[%s1168 + $0x58] sm:$0xff] %vm925, %v1167
        %v1181 = vld [vmem:[#allocation2] sm:$0xff]
        %v1182 = vld [vmem:[#allocation2 + $0x8] sm:$0xff]
        %v1183 = vld [vmem:[#allocation2 + $0x10] sm:$0xff]
        %v1184 = vld [vmem:[#allocation2 + $0x18] sm:$0xff]
        %v1185 = vld [vmem:[#allocation2 + $0x20] sm:$0xff]
        %v1186 = vld [vmem:[#allocation2 + $0x28] sm:$0xff]
        %v1187 = vld [vmem:[#allocation2 + $0x30] sm:$0xff]
        %v1188 = vld [vmem:[#allocation2 + $0x38] sm:$0xff]
        %v1189 = vld [vmem:[#allocation2 + $0x40] sm:$0xff]
        %v1190 = vld [vmem:[#allocation2 + $0x48] sm:$0xff]
        %v1191 = vld [vmem:[#allocation2 + $0x50] sm:$0xff]
        %v1192 = vld [vmem:[#allocation2 + $0x58] sm:$0xff]
        %v1193 = vld [vmem:[#allocation2 + $0x60] sm:$0xff]
        %v1194 = vld [vmem:[#allocation2 + $0x68] sm:$0xff]
        %v1195 = vld [vmem:[#allocation2 + $0x70] sm:$0xff]
        %v1196 = vld [vmem:[#allocation2 + $0x78] sm:$0xff]
        %v1197 = vld [vmem:[#allocation2 + $0x80] sm:$0xff]
        %v1198 = vld [vmem:[#allocation2 + $0x88] sm:$0xff]
        %v1199 = vld [vmem:[#allocation2 + $0x90] sm:$0xff]
        %v1200 = vld [vmem:[#allocation2 + $0x98] sm:$0xff]
        %v1201 = vld [vmem:[#allocation2 + $0xa0] sm:$0xff]
        %v1202 = vld [vmem:[#allocation2 + $0xa8] sm:$0xff]
        %v1203 = vld [vmem:[#allocation2 + $0xb0] sm:$0xff]
        %v1204 = vld [vmem:[#allocation2 + $0xb8] sm:$0xff]
        %v1205 = vld [vmem:[#allocation2 + $0xc0] sm:$0xff]
        %v1206 = vld [vmem:[#allocation2 + $0xc8] sm:$0xff]
        %v1207 = vld [vmem:[#allocation2 + $0xd0] sm:$0xff]
        %v1208 = vld [vmem:[#allocation2 + $0xd8] sm:$0xff]
        %v1209 = vld [vmem:[#allocation2 + $0xe0] sm:$0xff]
        %v1210 = vld [vmem:[#allocation2 + $0xe8] sm:$0xff]
        %v1211 = vld [vmem:[#allocation2 + $0xf0] sm:$0xff]
        %v1212 = vld [vmem:[#allocation2 + $0xf8] sm:$0xff]
        %v1213 = vld [vmem:[#allocation2 + $0x100] sm:$0xff]
        %v1214 = vld [vmem:[#allocation2 + $0x108] sm:$0xff]
        %v1215 = vld [vmem:[#allocation2 + $0x110] sm:$0xff]
        %v1216 = vld [vmem:[#allocation2 + $0x118] sm:$0xff]
        %v1217 = vld [vmem:[#allocation2 + $0x120] sm:$0xff]
        %v1218 = vld [vmem:[#allocation2 + $0x128] sm:$0xff]
        %v1219 = vld [vmem:[#allocation2 + $0x130] sm:$0xff]
        %v1220 = vld [vmem:[#allocation2 + $0x138] sm:$0xff]
        %v1221 = vld [vmem:[#allocation2 + $0x140] sm:$0xff]
        %v1222 = vld [vmem:[#allocation2 + $0x148] sm:$0xff]
        %s1223 = scalar_lea.vmem [#allocation2], 16
        %v1224 = vld [vmem:[%s1223] sm:$0xff]
        %v1225 = vld [vmem:[%s1223 + $0x8] sm:$0xff]
        %v1226 = vld [vmem:[%s1223 + $0x10] sm:$0xff]
        %v1227 = vld [vmem:[%s1223 + $0x18] sm:$0xff]
        %v1228 = vld [vmem:[%s1223 + $0x20] sm:$0xff]
        %v1229 = vld [vmem:[%s1223 + $0x28] sm:$0xff]
        %v1230 = vld [vmem:[%s1223 + $0x30] sm:$0xff]
        %v1231 = vld [vmem:[%s1223 + $0x38] sm:$0xff]
        %v1232 = vld [vmem:[%s1223 + $0x40] sm:$0xff]
        %v1233 = vld [vmem:[%s1223 + $0x48] sm:$0xff]
        %v1234 = vld [vmem:[%s1223 + $0x50] sm:$0xff]
        %v1235 = vld [vmem:[%s1223 + $0x58] sm:$0xff]
        %v1236 = vld [vmem:[%s1223 + $0x60] sm:$0xff]
        %v1237 = vld [vmem:[%s1223 + $0x68] sm:$0xff]
        %v1238 = vld [vmem:[%s1223 + $0x70] sm:$0xff]
        %v1239 = vld [vmem:[%s1223 + $0x78] sm:$0xff]
        %v1240 = vld [vmem:[%s1223 + $0x80] sm:$0xff]
        %v1241 = vld [vmem:[%s1223 + $0x88] sm:$0xff]
        %v1242 = vld [vmem:[%s1223 + $0x90] sm:$0xff]
        %v1243 = vld [vmem:[%s1223 + $0x98] sm:$0xff]
        %v1244 = vld [vmem:[%s1223 + $0xa0] sm:$0xff]
        %v1245 = vld [vmem:[%s1223 + $0xa8] sm:$0xff]
        %v1246 = vld [vmem:[%s1223 + $0xb0] sm:$0xff]
        %v1247 = vld [vmem:[%s1223 + $0xb8] sm:$0xff]
        %v1248 = vld [vmem:[%s1223 + $0xc0] sm:$0xff]
        %v1249 = vld [vmem:[%s1223 + $0xc8] sm:$0xff]
        %v1250 = vld [vmem:[%s1223 + $0xd0] sm:$0xff]
        %v1251 = vld [vmem:[%s1223 + $0xd8] sm:$0xff]
        %v1252 = vld [vmem:[%s1223 + $0xe0] sm:$0xff]
        %v1253 = vld [vmem:[%s1223 + $0xe8] sm:$0xff]
        %v1254 = vld [vmem:[%s1223 + $0xf0] sm:$0xff]
        %v1255 = vld [vmem:[%s1223 + $0xf8] sm:$0xff]
        %v1256 = vld [vmem:[%s1223 + $0x100] sm:$0xff]
        %v1257 = vld [vmem:[%s1223 + $0x108] sm:$0xff]
        %v1258 = vld [vmem:[%s1223 + $0x110] sm:$0xff]
        %v1259 = vld [vmem:[%s1223 + $0x118] sm:$0xff]
        %v1260 = vld [vmem:[%s1223 + $0x120] sm:$0xff]
        %v1261 = vld [vmem:[%s1223 + $0x128] sm:$0xff]
        %v1262 = vld [vmem:[%s1223 + $0x130] sm:$0xff]
        %v1263 = vld [vmem:[%s1223 + $0x138] sm:$0xff]
        %v1264 = vld [vmem:[%s1223 + $0x140] sm:$0xff]
        %v1265 = vld [vmem:[%s1223 + $0x148] sm:$0xff]
        %v1266 = vmax.f32 %v1181, %v1224
        %v1267 = vmax.f32 %v1182, %v1225
        %v1268 = vmax.f32 %v1183, %v1226
        %v1269 = vmax.f32 %v1184, %v1227
        %v1270 = vmax.f32 %v1185, %v1228
        %v1271 = vmax.f32 %v1186, %v1229
        %v1272 = vmax.f32 %v1187, %v1230
        %v1273 = vmax.f32 %v1188, %v1231
        %v1274 = vmax.f32 %v1189, %v1232
        %v1275 = vmax.f32 %v1190, %v1233
        %v1276 = vmax.f32 %v1191, %v1234
        %v1277 = vmax.f32 %v1192, %v1235
        %v1278 = vmax.f32 %v1193, %v1236
        %v1279 = vmax.f32 %v1194, %v1237
        %v1280 = vmax.f32 %v1195, %v1238
        %v1281 = vmax.f32 %v1196, %v1239
        %v1282 = vmax.f32 %v1197, %v1240
        %v1283 = vmax.f32 %v1198, %v1241
        %v1284 = vmax.f32 %v1199, %v1242
        %v1285 = vmax.f32 %v1200, %v1243
        %v1286 = vmax.f32 %v1201, %v1244
        %v1287 = vmax.f32 %v1202, %v1245
        %v1288 = vmax.f32 %v1203, %v1246
        %v1289 = vmax.f32 %v1204, %v1247
        %v1290 = vmax.f32 %v1205, %v1248
        %v1291 = vmax.f32 %v1206, %v1249
        %v1292 = vmax.f32 %v1207, %v1250
        %v1293 = vmax.f32 %v1208, %v1251
        %v1294 = vmax.f32 %v1209, %v1252
        %v1295 = vmax.f32 %v1210, %v1253
        %v1296 = vmax.f32 %v1211, %v1254
        %v1297 = vmax.f32 %v1212, %v1255
        %v1298 = vmax.f32 %v1213, %v1256
        %v1299 = vmax.f32 %v1214, %v1257
        %v1300 = vmax.f32 %v1215, %v1258
        %v1301 = vmax.f32 %v1216, %v1259
        %v1302 = vmax.f32 %v1217, %v1260
        %v1303 = vmax.f32 %v1218, %v1261
        %v1304 = vmax.f32 %v1219, %v1262
        %v1305 = vmax.f32 %v1220, %v1263
        %v1306 = vmax.f32 %v1221, %v1264
        %v1307 = vmax.f32 %v1222, %v1265
        %v1308 = vmax.f32 %v1266, %v1270
        %v1309 = vmax.f32 %v1267, %v1271
        %v1310 = vmax.f32 %v1268, %v1272
        %v1311 = vmax.f32 %v1269, %v1273
        %v1312 = vmax.f32 %v1270, %v1274
        %v1313 = vmax.f32 %v1271, %v1275
        %v1314 = vmax.f32 %v1272, %v1276
        %v1315 = vmax.f32 %v1273, %v1277
        %v1316 = vmax.f32 %v1274, %v1278
        %v1317 = vmax.f32 %v1275, %v1279
        %v1318 = vmax.f32 %v1276, %v1280
        %v1319 = vmax.f32 %v1277, %v1281
        %v1320 = vmax.f32 %v1278, %v1282
        %v1321 = vmax.f32 %v1279, %v1283
        %v1322 = vmax.f32 %v1280, %v1284
        %v1323 = vmax.f32 %v1281, %v1285
        %v1324 = vmax.f32 %v1282, %v1286
        %v1325 = vmax.f32 %v1283, %v1287
        %v1326 = vmax.f32 %v1284, %v1288
        %v1327 = vmax.f32 %v1285, %v1289
        %v1328 = vmax.f32 %v1286, %v1290
        %v1329 = vmax.f32 %v1287, %v1291
        %v1330 = vmax.f32 %v1288, %v1292
        %v1331 = vmax.f32 %v1289, %v1293
        %v1332 = vmax.f32 %v1290, %v1294
        %v1333 = vmax.f32 %v1291, %v1295
        %v1334 = vmax.f32 %v1292, %v1296
        %v1335 = vmax.f32 %v1293, %v1297
        %v1336 = vmax.f32 %v1294, %v1298
        %v1337 = vmax.f32 %v1295, %v1299
        %v1338 = vmax.f32 %v1296, %v1300
        %v1339 = vmax.f32 %v1297, %v1301
        %v1340 = vmax.f32 %v1298, %v1302
        %v1341 = vmax.f32 %v1299, %v1303
        %v1342 = vmax.f32 %v1300, %v1304
        %v1343 = vmax.f32 %v1301, %v1305
        %v1344 = vmax.f32 %v1302, %v1306
        %v1345 = vmax.f32 %v1303, %v1307
        %v1346 = vmax.f32 %v1308, %v1314
        %v1347 = vmax.f32 %v1309, %v1315
        %v1348 = vmax.f32 %v1310, %v1316
        %v1349 = vmax.f32 %v1311, %v1317
        %v1350 = vmax.f32 %v1312, %v1318
        %v1351 = vmax.f32 %v1313, %v1319
        %v1352 = vmax.f32 %v1314, %v1320
        %v1353 = vmax.f32 %v1315, %v1321
        %v1354 = vmax.f32 %v1316, %v1322
        %v1355 = vmax.f32 %v1317, %v1323
        %v1356 = vmax.f32 %v1318, %v1324
        %v1357 = vmax.f32 %v1319, %v1325
        %v1358 = vmax.f32 %v1320, %v1326
        %v1359 = vmax.f32 %v1321, %v1327
        %v1360 = vmax.f32 %v1322, %v1328
        %v1361 = vmax.f32 %v1323, %v1329
        %v1362 = vmax.f32 %v1324, %v1330
        %v1363 = vmax.f32 %v1325, %v1331
        %v1364 = vmax.f32 %v1326, %v1332
        %v1365 = vmax.f32 %v1327, %v1333
        %v1366 = vmax.f32 %v1328, %v1334
        %v1367 = vmax.f32 %v1329, %v1335
        %v1368 = vmax.f32 %v1330, %v1336
        %v1369 = vmax.f32 %v1331, %v1337
        %v1370 = vmax.f32 %v1332, %v1338
        %v1371 = vmax.f32 %v1333, %v1339
        %v1372 = vmax.f32 %v1334, %v1340
        %v1373 = vmax.f32 %v1335, %v1341
        %v1374 = vmax.f32 %v1336, %v1342
        %v1375 = vmax.f32 %v1337, %v1343
        %v1376 = vmax.f32 %v1338, %v1344
        %v1377 = vmax.f32 %v1339, %v1345
        %v1378 = vpack.c.bf16 %v1347, %v1346
        %v1379 = vpack.c.bf16 %v1349, %v1348
        %v1380 = vpack.c.bf16 %v1351, %v1350
        %v1381 = vpack.c.bf16 %v1353, %v1352
        %v1382 = vpack.c.bf16 %v1355, %v1354
        %v1383 = vpack.c.bf16 %v1357, %v1356
        %v1384 = vpack.c.bf16 %v1359, %v1358
        %v1385 = vpack.c.bf16 %v1361, %v1360
        %v1386 = vpack.c.bf16 %v1363, %v1362
        %v1387 = vpack.c.bf16 %v1365, %v1364
        %v1388 = vpack.c.bf16 %v1367, %v1366
        %v1389 = vpack.c.bf16 %v1369, %v1368
        %v1390 = vpack.c.bf16 %v1371, %v1370
        %v1391 = vpack.c.bf16 %v1373, %v1372
        %v1392 = vpack.c.bf16 %v1375, %v1374
        %v1393 = vpack.c.bf16 %v1377, %v1376
        %v1394 = vld [vmem:[%s2] sm:$0xf]
        %v1395 = vld [vmem:[%s2 + $0x4] sm:$0xf]
        %v1396 = vld [vmem:[%s2 + $0x8] sm:$0xf]
        %v1397 = vld [vmem:[%s2 + $0xc] sm:$0xf]
        %v1398 = vld [vmem:[%s3] sm:$0x1]
        %v1400 = vperm.slane %v1398, 0
        %v1406 = vunpack.c.l.b16 %v1394
        %v1407 = vunpack.c.l.b16 %v1395
        %v1408 = vunpack.c.l.b16 %v1396
        %v1409 = vunpack.c.l.b16 %v1397
        %v1410 = vpack.c.b16 %v1407, %v1406
        %v1411 = vpack.c.b16 %v1409, %v1408
        %v1415 = vsel %vm925, %v1378, 0
        %v1418 = vsel %vm925, %v1379, 0
        %v1421 = vsel %vm925, %v1380, 0
        %v1424 = vsel %vm925, %v1381, 0
        %v1427 = vsel %vm925, %v1382, 0
        %v1430 = vsel %vm925, %v1383, 0
        %v1433 = vsel %vm925, %v1384, 0
        %v1436 = vsel %vm925, %v1385, 0
        %v1439 = vsel %vm925, %v1386, 0
        %v1442 = vsel %vm925, %v1387, 0
        %v1445 = vsel %vm925, %v1388, 0
        %v1448 = vsel %vm925, %v1389, 0
        %v1451 = vsel %vm925, %v1390, 0
        %v1454 = vsel %vm925, %v1391, 0
        %v1457 = vsel %vm925, %v1392, 0
        %v1460 = vsel %vm925, %v1393, 0
        %1462 = vmatpush.bf16.msra.mxu0 0
        %1463 = vmatpush.bf16.msra.mxu0 0
        %1464 = vmatpush.bf16.msra.mxu0 0
        %1465 = vmatpush.bf16.msra.mxu0 0
        %1466 = vmatpush.bf16.msra.mxu0 0
        %1467 = vmatpush.bf16.msra.mxu0 0
        %1468 = vmatpush.bf16.msra.mxu0 %v1411
        %1469 = vmatpush.bf16.msra.mxu0 %v1410
        %1470 = vmatmul.bf16.gmra.mxu0 %v1415
        %v1471 = vpop.f32.mrf.mxu0
        %v1472 = vadd.f32 %v1400, %v1471
        %v1473 = vpop.f32.mrf.mxu0
        %v1474 = vadd.f32 %v1400, %v1473
        %1475 = vmatmul.bf16.gmra.mxu0 %v1418
        %v1476 = vpop.f32.mrf.mxu0
        %v1477 = vadd.f32 %v1400, %v1476
        %v1478 = vpop.f32.mrf.mxu0
        %v1479 = vadd.f32 %v1400, %v1478
        %1480 = vmatmul.bf16.gmra.mxu0 %v1421
        %v1481 = vpop.f32.mrf.mxu0
        %v1482 = vadd.f32 %v1400, %v1481
        %v1483 = vpop.f32.mrf.mxu0
        %v1484 = vadd.f32 %v1400, %v1483
        %1485 = vmatmul.bf16.gmra.mxu0 %v1424
        %v1486 = vpop.f32.mrf.mxu0
        %v1487 = vadd.f32 %v1400, %v1486
        %v1488 = vpop.f32.mrf.mxu0
        %v1489 = vadd.f32 %v1400, %v1488
        %1490 = vmatmul.bf16.gmra.mxu0 %v1427
        %v1491 = vpop.f32.mrf.mxu0
        %v1492 = vadd.f32 %v1400, %v1491
        %v1493 = vpop.f32.mrf.mxu0
        %v1494 = vadd.f32 %v1400, %v1493
        %1495 = vmatmul.bf16.gmra.mxu0 %v1430
        %v1496 = vpop.f32.mrf.mxu0
        %v1497 = vadd.f32 %v1400, %v1496
        %v1498 = vpop.f32.mrf.mxu0
        %v1499 = vadd.f32 %v1400, %v1498
        %1500 = vmatmul.bf16.gmra.mxu0 %v1433
        %v1501 = vpop.f32.mrf.mxu0
        %v1502 = vadd.f32 %v1400, %v1501
        %v1503 = vpop.f32.mrf.mxu0
        %v1504 = vadd.f32 %v1400, %v1503
        %1505 = vmatmul.bf16.gmra.mxu0 %v1436
        %v1506 = vpop.f32.mrf.mxu0
        %v1507 = vadd.f32 %v1400, %v1506
        %v1508 = vpop.f32.mrf.mxu0
        %v1509 = vadd.f32 %v1400, %v1508
        %1510 = vmatmul.bf16.gmra.mxu0 %v1439
        %v1511 = vpop.f32.mrf.mxu0
        %v1512 = vadd.f32 %v1400, %v1511
        %v1513 = vpop.f32.mrf.mxu0
        %v1514 = vadd.f32 %v1400, %v1513
        %1515 = vmatmul.bf16.gmra.mxu0 %v1442
        %v1516 = vpop.f32.mrf.mxu0
        %v1517 = vadd.f32 %v1400, %v1516
        %v1518 = vpop.f32.mrf.mxu0
        %v1519 = vadd.f32 %v1400, %v1518
        %1520 = vmatmul.bf16.gmra.mxu0 %v1445
        %v1521 = vpop.f32.mrf.mxu0
        %v1522 = vadd.f32 %v1400, %v1521
        %v1523 = vpop.f32.mrf.mxu0
        %v1524 = vadd.f32 %v1400, %v1523
        %1525 = vmatmul.bf16.gmra.mxu0 %v1448
        %v1526 = vpop.f32.mrf.mxu0
        %v1527 = vadd.f32 %v1400, %v1526
        %v1528 = vpop.f32.mrf.mxu0
        %v1529 = vadd.f32 %v1400, %v1528
        %1530 = vmatmul.bf16.gmra.mxu0 %v1451
        %v1531 = vpop.f32.mrf.mxu0
        %v1532 = vadd.f32 %v1400, %v1531
        %v1533 = vpop.f32.mrf.mxu0
        %v1534 = vadd.f32 %v1400, %v1533
        %1535 = vmatmul.bf16.gmra.mxu0 %v1454
        %v1536 = vpop.f32.mrf.mxu0
        %v1537 = vadd.f32 %v1400, %v1536
        %v1538 = vpop.f32.mrf.mxu0
        %v1539 = vadd.f32 %v1400, %v1538
        %1540 = vmatmul.bf16.gmra.mxu0 %v1457
        %v1541 = vpop.f32.mrf.mxu0
        %v1542 = vadd.f32 %v1400, %v1541
        %v1543 = vpop.f32.mrf.mxu0
        %v1544 = vadd.f32 %v1400, %v1543
        %1545 = vmatmul.bf16.gmra.mxu0 %v1460
        %v1546 = vpop.f32.mrf.mxu0
        %v1547 = vadd.f32 %v1400, %v1546
        %v1548 = vpop.f32.mrf.mxu0
        %v1549 = vadd.f32 %v1400, %v1548
        %1550 = vdwg.mxu0
        %v1551 = vmax.f32 %v1472, 0.0
        %v1552 = vmax.f32 %v1474, 0.0
        %v1553 = vmax.f32 %v1477, 0.0
        %v1554 = vmax.f32 %v1479, 0.0
        %v1555 = vmax.f32 %v1482, 0.0
        %v1556 = vmax.f32 %v1484, 0.0
        %v1557 = vmax.f32 %v1487, 0.0
        %v1558 = vmax.f32 %v1489, 0.0
        %v1559 = vmax.f32 %v1492, 0.0
        %v1560 = vmax.f32 %v1494, 0.0
        %v1561 = vmax.f32 %v1497, 0.0
        %v1562 = vmax.f32 %v1499, 0.0
        %v1563 = vmax.f32 %v1502, 0.0
        %v1564 = vmax.f32 %v1504, 0.0
        %v1565 = vmax.f32 %v1507, 0.0
        %v1566 = vmax.f32 %v1509, 0.0
        %v1567 = vmax.f32 %v1512, 0.0
        %v1568 = vmax.f32 %v1514, 0.0
        %v1569 = vmax.f32 %v1517, 0.0
        %v1570 = vmax.f32 %v1519, 0.0
        %v1571 = vmax.f32 %v1522, 0.0
        %v1572 = vmax.f32 %v1524, 0.0
        %v1573 = vmax.f32 %v1527, 0.0
        %v1574 = vmax.f32 %v1529, 0.0
        %v1575 = vmax.f32 %v1532, 0.0
        %v1576 = vmax.f32 %v1534, 0.0
        %v1577 = vmax.f32 %v1537, 0.0
        %v1578 = vmax.f32 %v1539, 0.0
        %v1579 = vmax.f32 %v1542, 0.0
        %v1580 = vmax.f32 %v1544, 0.0
        %v1581 = vmax.f32 %v1547, 0.0
        %v1582 = vmax.f32 %v1549, 0.0
        %v1583 = vpack.c.bf16 %v1552, %v1551
        %v1584 = vpack.c.bf16 %v1554, %v1553
        %v1585 = vpack.c.bf16 %v1556, %v1555
        %v1586 = vpack.c.bf16 %v1558, %v1557
        %v1587 = vpack.c.bf16 %v1560, %v1559
        %v1588 = vpack.c.bf16 %v1562, %v1561
        %v1589 = vpack.c.bf16 %v1564, %v1563
        %v1590 = vpack.c.bf16 %v1566, %v1565
        %v1591 = vpack.c.bf16 %v1568, %v1567
        %v1592 = vpack.c.bf16 %v1570, %v1569
        %v1593 = vpack.c.bf16 %v1572, %v1571
        %v1594 = vpack.c.bf16 %v1574, %v1573
        %v1595 = vpack.c.bf16 %v1576, %v1575
        %v1596 = vpack.c.bf16 %v1578, %v1577
        %v1597 = vpack.c.bf16 %v1580, %v1579
        %v1598 = vpack.c.bf16 %v1582, %v1581
        %v1599 = vld [vmem:[%s4] sm:$0x1]
        %v1600 = vld [vmem:[%s5] sm:$0x1]
        %v1602 = vperm.slane %v1600, 0
        %vm1604 = vcmask 15360
        %v1606 = vsel %vm1604, %v1583, 0
        %v1609 = vsel %vm1604, %v1584, 0
        %v1612 = vsel %vm1604, %v1585, 0
        %v1615 = vsel %vm1604, %v1586, 0
        %v1618 = vsel %vm1604, %v1587, 0
        %v1621 = vsel %vm1604, %v1588, 0
        %v1624 = vsel %vm1604, %v1589, 0
        %v1627 = vsel %vm1604, %v1590, 0
        %v1630 = vsel %vm1604, %v1591, 0
        %v1633 = vsel %vm1604, %v1592, 0
        %v1636 = vsel %vm1604, %v1593, 0
        %v1639 = vsel %vm1604, %v1594, 0
        %v1642 = vsel %vm1604, %v1595, 0
        %v1645 = vsel %vm1604, %v1596, 0
        %v1648 = vsel %vm1604, %v1597, 0
        %v1651 = vsel %vm1604, %v1598, 0
        %vm1653 = vcmask 1040384
        %v1655 = vsel %vm1653, %v1599, 0
        %1657 = vmatpush.bf16.msra.mxu0 0
        %1658 = vmatpush.bf16.msra.mxu0 0
        %1659 = vmatpush.bf16.msra.mxu0 0
        %1660 = vmatpush.bf16.msra.mxu0 0
        %1661 = vmatpush.bf16.msra.mxu0 0
        %1662 = vmatpush.bf16.msra.mxu0 0
        %1663 = vmatpush.bf16.msra.mxu0 0
        %1664 = vmatpush.bf16.msra.mxu0 %v1655
        %1665 = vmatmul.bf16.gmra.mxu0 %v1606
        %v1666 = vpop.f32.mrf.mxu0
        %v1667 = vadd.f32 %v1602, %v1666
        %v1668 = vpop.f32.mrf.mxu0
        %v1669 = vadd.f32 %v1602, %v1668
        %1670 = vmatmul.bf16.gmra.mxu0 %v1609
        %v1671 = vpop.f32.mrf.mxu0
        %v1672 = vadd.f32 %v1602, %v1671
        %v1673 = vpop.f32.mrf.mxu0
        %v1674 = vadd.f32 %v1602, %v1673
        %1675 = vmatmul.bf16.gmra.mxu0 %v1612
        %v1676 = vpop.f32.mrf.mxu0
        %v1677 = vadd.f32 %v1602, %v1676
        %v1678 = vpop.f32.mrf.mxu0
        %v1679 = vadd.f32 %v1602, %v1678
        %1680 = vmatmul.bf16.gmra.mxu0 %v1615
        %v1681 = vpop.f32.mrf.mxu0
        %v1682 = vadd.f32 %v1602, %v1681
        %v1683 = vpop.f32.mrf.mxu0
        %v1684 = vadd.f32 %v1602, %v1683
        %1685 = vmatmul.bf16.gmra.mxu0 %v1618
        %v1686 = vpop.f32.mrf.mxu0
        %v1687 = vadd.f32 %v1602, %v1686
        %v1688 = vpop.f32.mrf.mxu0
        %v1689 = vadd.f32 %v1602, %v1688
        %1690 = vmatmul.bf16.gmra.mxu0 %v1621
        %v1691 = vpop.f32.mrf.mxu0
        %v1692 = vadd.f32 %v1602, %v1691
        %v1693 = vpop.f32.mrf.mxu0
        %v1694 = vadd.f32 %v1602, %v1693
        %1695 = vmatmul.bf16.gmra.mxu0 %v1624
        %v1696 = vpop.f32.mrf.mxu0
        %v1697 = vadd.f32 %v1602, %v1696
        %v1698 = vpop.f32.mrf.mxu0
        %v1699 = vadd.f32 %v1602, %v1698
        %1700 = vmatmul.bf16.gmra.mxu0 %v1627
        %v1701 = vpop.f32.mrf.mxu0
        %v1702 = vadd.f32 %v1602, %v1701
        %v1703 = vpop.f32.mrf.mxu0
        %v1704 = vadd.f32 %v1602, %v1703
        %1705 = vmatmul.bf16.gmra.mxu0 %v1630
        %v1706 = vpop.f32.mrf.mxu0
        %v1707 = vadd.f32 %v1602, %v1706
        %v1708 = vpop.f32.mrf.mxu0
        %v1709 = vadd.f32 %v1602, %v1708
        %1710 = vmatmul.bf16.gmra.mxu0 %v1633
        %v1711 = vpop.f32.mrf.mxu0
        %v1712 = vadd.f32 %v1602, %v1711
        %v1713 = vpop.f32.mrf.mxu0
        %v1714 = vadd.f32 %v1602, %v1713
        %1715 = vmatmul.bf16.gmra.mxu0 %v1636
        %v1716 = vpop.f32.mrf.mxu0
        %v1717 = vadd.f32 %v1602, %v1716
        %v1718 = vpop.f32.mrf.mxu0
        %v1719 = vadd.f32 %v1602, %v1718
        %1720 = vmatmul.bf16.gmra.mxu0 %v1639
        %v1721 = vpop.f32.mrf.mxu0
        %v1722 = vadd.f32 %v1602, %v1721
        %v1723 = vpop.f32.mrf.mxu0
        %v1724 = vadd.f32 %v1602, %v1723
        %1725 = vmatmul.bf16.gmra.mxu0 %v1642
        %v1726 = vpop.f32.mrf.mxu0
        %v1727 = vadd.f32 %v1602, %v1726
        %v1728 = vpop.f32.mrf.mxu0
        %v1729 = vadd.f32 %v1602, %v1728
        %1730 = vmatmul.bf16.gmra.mxu0 %v1645
        %v1731 = vpop.f32.mrf.mxu0
        %v1732 = vadd.f32 %v1602, %v1731
        %v1733 = vpop.f32.mrf.mxu0
        %v1734 = vadd.f32 %v1602, %v1733
        %1735 = vmatmul.bf16.gmra.mxu0 %v1648
        %v1736 = vpop.f32.mrf.mxu0
        %v1737 = vadd.f32 %v1602, %v1736
        %v1738 = vpop.f32.mrf.mxu0
        %v1739 = vadd.f32 %v1602, %v1738
        %1740 = vmatmul.bf16.gmra.mxu0 %v1651
        %v1741 = vpop.f32.mrf.mxu0
        %v1742 = vadd.f32 %v1602, %v1741
        %v1743 = vpop.f32.mrf.mxu0
        %v1744 = vadd.f32 %v1602, %v1743
        %1745 = vdwg.mxu0
        %v1746 = vsub.f32 0.0, %v1667
        %v1747 = vsub.f32 0.0, %v1669
        %v1748 = vsub.f32 0.0, %v1672
        %v1749 = vsub.f32 0.0, %v1674
        %v1750 = vsub.f32 0.0, %v1677
        %v1751 = vsub.f32 0.0, %v1679
        %v1752 = vsub.f32 0.0, %v1682
        %v1753 = vsub.f32 0.0, %v1684
        %v1754 = vsub.f32 0.0, %v1687
        %v1755 = vsub.f32 0.0, %v1689
        %v1756 = vsub.f32 0.0, %v1692
        %v1757 = vsub.f32 0.0, %v1694
        %v1758 = vsub.f32 0.0, %v1697
        %v1759 = vsub.f32 0.0, %v1699
        %v1760 = vsub.f32 0.0, %v1702
        %v1761 = vsub.f32 0.0, %v1704
        %v1762 = vsub.f32 0.0, %v1707
        %v1763 = vsub.f32 0.0, %v1709
        %v1764 = vsub.f32 0.0, %v1712
        %v1765 = vsub.f32 0.0, %v1714
        %v1766 = vsub.f32 0.0, %v1717
        %v1767 = vsub.f32 0.0, %v1719
        %v1768 = vsub.f32 0.0, %v1722
        %v1769 = vsub.f32 0.0, %v1724
        %v1770 = vsub.f32 0.0, %v1727
        %v1771 = vsub.f32 0.0, %v1729
        %v1772 = vsub.f32 0.0, %v1732
        %v1773 = vsub.f32 0.0, %v1734
        %v1774 = vsub.f32 0.0, %v1737
        %v1775 = vsub.f32 0.0, %v1739
        %v1776 = vsub.f32 0.0, %v1742
        %v1777 = vsub.f32 0.0, %v1744
        %v1778 = vmul.f32 %v1746, 1.442695
        %v1779 = vpow.pop %v1778
        %v1780 = vmul.f32 %v1747, 1.442695
        %v1781 = vpow.pop %v1780
        %v1782 = vmul.f32 %v1748, 1.442695
        %v1783 = vpow.pop %v1782
        %v1784 = vmul.f32 %v1749, 1.442695
        %v1785 = vpow.pop %v1784
        %v1786 = vmul.f32 %v1750, 1.442695
        %v1787 = vpow.pop %v1786
        %v1788 = vmul.f32 %v1751, 1.442695
        %v1789 = vpow.pop %v1788
        %v1790 = vmul.f32 %v1752, 1.442695
        %v1791 = vpow.pop %v1790
        %v1792 = vmul.f32 %v1753, 1.442695
        %v1793 = vpow.pop %v1792
        %v1794 = vmul.f32 %v1754, 1.442695
        %v1795 = vpow.pop %v1794
        %v1796 = vmul.f32 %v1755, 1.442695
        %v1797 = vpow.pop %v1796
        %v1798 = vmul.f32 %v1756, 1.442695
        %v1799 = vpow.pop %v1798
        %v1800 = vmul.f32 %v1757, 1.442695
        %v1801 = vpow.pop %v1800
        %v1802 = vmul.f32 %v1758, 1.442695
        %v1803 = vpow.pop %v1802
        %v1804 = vmul.f32 %v1759, 1.442695
        %v1805 = vpow.pop %v1804
        %v1806 = vmul.f32 %v1760, 1.442695
        %v1807 = vpow.pop %v1806
        %v1808 = vmul.f32 %v1761, 1.442695
        %v1809 = vpow.pop %v1808
        %v1810 = vmul.f32 %v1762, 1.442695
        %v1811 = vpow.pop %v1810
        %v1812 = vmul.f32 %v1763, 1.442695
        %v1813 = vpow.pop %v1812
        %v1814 = vmul.f32 %v1764, 1.442695
        %v1815 = vpow.pop %v1814
        %v1816 = vmul.f32 %v1765, 1.442695
        %v1817 = vpow.pop %v1816
        %v1818 = vmul.f32 %v1766, 1.442695
        %v1819 = vpow.pop %v1818
        %v1820 = vmul.f32 %v1767, 1.442695
        %v1821 = vpow.pop %v1820
        %v1822 = vmul.f32 %v1768, 1.442695
        %v1823 = vpow.pop %v1822
        %v1824 = vmul.f32 %v1769, 1.442695
        %v1825 = vpow.pop %v1824
        %v1826 = vmul.f32 %v1770, 1.442695
        %v1827 = vpow.pop %v1826
        %v1828 = vmul.f32 %v1771, 1.442695
        %v1829 = vpow.pop %v1828
        %v1830 = vmul.f32 %v1772, 1.442695
        %v1831 = vpow.pop %v1830
        %v1832 = vmul.f32 %v1773, 1.442695
        %v1833 = vpow.pop %v1832
        %v1834 = vmul.f32 %v1774, 1.442695
        %v1835 = vpow.pop %v1834
        %v1836 = vmul.f32 %v1775, 1.442695
        %v1837 = vpow.pop %v1836
        %v1838 = vmul.f32 %v1776, 1.442695
        %v1839 = vpow.pop %v1838
        %v1840 = vmul.f32 %v1777, 1.442695
        %v1841 = vpow.pop %v1840
        %v1842 = vadd.f32 %v1779, 1.0
        %v1843 = vadd.f32 %v1781, 1.0
        %v1844 = vadd.f32 %v1783, 1.0
        %v1845 = vadd.f32 %v1785, 1.0
        %v1846 = vadd.f32 %v1787, 1.0
        %v1847 = vadd.f32 %v1789, 1.0
        %v1848 = vadd.f32 %v1791, 1.0
        %v1849 = vadd.f32 %v1793, 1.0
        %v1850 = vadd.f32 %v1795, 1.0
        %v1851 = vadd.f32 %v1797, 1.0
        %v1852 = vadd.f32 %v1799, 1.0
        %v1853 = vadd.f32 %v1801, 1.0
        %v1854 = vadd.f32 %v1803, 1.0
        %v1855 = vadd.f32 %v1805, 1.0
        %v1856 = vadd.f32 %v1807, 1.0
        %v1857 = vadd.f32 %v1809, 1.0
        %v1858 = vadd.f32 %v1811, 1.0
        %v1859 = vadd.f32 %v1813, 1.0
        %v1860 = vadd.f32 %v1815, 1.0
        %v1861 = vadd.f32 %v1817, 1.0
        %v1862 = vadd.f32 %v1819, 1.0
        %v1863 = vadd.f32 %v1821, 1.0
        %v1864 = vadd.f32 %v1823, 1.0
        %v1865 = vadd.f32 %v1825, 1.0
        %v1866 = vadd.f32 %v1827, 1.0
        %v1867 = vadd.f32 %v1829, 1.0
        %v1868 = vadd.f32 %v1831, 1.0
        %v1869 = vadd.f32 %v1833, 1.0
        %v1870 = vadd.f32 %v1835, 1.0
        %v1871 = vadd.f32 %v1837, 1.0
        %v1872 = vadd.f32 %v1839, 1.0
        %v1873 = vadd.f32 %v1841, 1.0
        %v1874 = vrcp.pop %v1842
        %v1875 = vmul.f32 %v1842, %v1874
        %v1876 = vsub.f32 1.0, %v1875
        %v1877 = vmul.f32 %v1874, %v1876
        %v1878 = vadd.f32 %v1874, %v1877
        %vm1879 = vweird.f32 %v1842
        %vm1880 = vweird.f32 %v1874
        %vm1881 = vmor %vm1879, %vm1880
        %v1882 = vsel %vm1881, %v1874, %v1878
        %v1883 = vand.u32 2147483647, %v1842
        %vm1884 = vcmp.eq.f32.partialorder %v1883, 8.507059e+37
        %v1885 = vand.u32 %v1842, 2147483648
        %v1886 = vor.u32 1.1754944e-38, %v1885
        %v1887 = vsel %vm1884, %v1886, %v1882
        %v1888 = vmul.f32 1.0, %v1887
        %v1889 = vrcp.pop %v1843
        %v1890 = vmul.f32 %v1843, %v1889
        %v1891 = vsub.f32 1.0, %v1890
        %v1892 = vmul.f32 %v1889, %v1891
        %v1893 = vadd.f32 %v1889, %v1892
        %vm1894 = vweird.f32 %v1843
        %vm1895 = vweird.f32 %v1889
        %vm1896 = vmor %vm1894, %vm1895
        %v1897 = vsel %vm1896, %v1889, %v1893
        %v1898 = vand.u32 2147483647, %v1843
        %vm1899 = vcmp.eq.f32.partialorder %v1898, 8.507059e+37
        %v1900 = vand.u32 %v1843, 2147483648
        %v1901 = vor.u32 1.1754944e-38, %v1900
        %v1902 = vsel %vm1899, %v1901, %v1897
        %v1903 = vmul.f32 1.0, %v1902
        %v1904 = vrcp.pop %v1844
        %v1905 = vmul.f32 %v1844, %v1904
        %v1906 = vsub.f32 1.0, %v1905
        %v1907 = vmul.f32 %v1904, %v1906
        %v1908 = vadd.f32 %v1904, %v1907
        %vm1909 = vweird.f32 %v1844
        %vm1910 = vweird.f32 %v1904
        %vm1911 = vmor %vm1909, %vm1910
        %v1912 = vsel %vm1911, %v1904, %v1908
        %v1913 = vand.u32 2147483647, %v1844
        %vm1914 = vcmp.eq.f32.partialorder %v1913, 8.507059e+37
        %v1915 = vand.u32 %v1844, 2147483648
        %v1916 = vor.u32 1.1754944e-38, %v1915
        %v1917 = vsel %vm1914, %v1916, %v1912
        %v1918 = vmul.f32 1.0, %v1917
        %v1919 = vrcp.pop %v1845
        %v1920 = vmul.f32 %v1845, %v1919
        %v1921 = vsub.f32 1.0, %v1920
        %v1922 = vmul.f32 %v1919, %v1921
        %v1923 = vadd.f32 %v1919, %v1922
        %vm1924 = vweird.f32 %v1845
        %vm1925 = vweird.f32 %v1919
        %vm1926 = vmor %vm1924, %vm1925
        %v1927 = vsel %vm1926, %v1919, %v1923
        %v1928 = vand.u32 2147483647, %v1845
        %vm1929 = vcmp.eq.f32.partialorder %v1928, 8.507059e+37
        %v1930 = vand.u32 %v1845, 2147483648
        %v1931 = vor.u32 1.1754944e-38, %v1930
        %v1932 = vsel %vm1929, %v1931, %v1927
        %v1933 = vmul.f32 1.0, %v1932
        %v1934 = vrcp.pop %v1846
        %v1935 = vmul.f32 %v1846, %v1934
        %v1936 = vsub.f32 1.0, %v1935
        %v1937 = vmul.f32 %v1934, %v1936
        %v1938 = vadd.f32 %v1934, %v1937
        %vm1939 = vweird.f32 %v1846
        %vm1940 = vweird.f32 %v1934
        %vm1941 = vmor %vm1939, %vm1940
        %v1942 = vsel %vm1941, %v1934, %v1938
        %v1943 = vand.u32 2147483647, %v1846
        %vm1944 = vcmp.eq.f32.partialorder %v1943, 8.507059e+37
        %v1945 = vand.u32 %v1846, 2147483648
        %v1946 = vor.u32 1.1754944e-38, %v1945
        %v1947 = vsel %vm1944, %v1946, %v1942
        %v1948 = vmul.f32 1.0, %v1947
        %v1949 = vrcp.pop %v1847
        %v1950 = vmul.f32 %v1847, %v1949
        %v1951 = vsub.f32 1.0, %v1950
        %v1952 = vmul.f32 %v1949, %v1951
        %v1953 = vadd.f32 %v1949, %v1952
        %vm1954 = vweird.f32 %v1847
        %vm1955 = vweird.f32 %v1949
        %vm1956 = vmor %vm1954, %vm1955
        %v1957 = vsel %vm1956, %v1949, %v1953
        %v1958 = vand.u32 2147483647, %v1847
        %vm1959 = vcmp.eq.f32.partialorder %v1958, 8.507059e+37
        %v1960 = vand.u32 %v1847, 2147483648
        %v1961 = vor.u32 1.1754944e-38, %v1960
        %v1962 = vsel %vm1959, %v1961, %v1957
        %v1963 = vmul.f32 1.0, %v1962
        %v1964 = vrcp.pop %v1848
        %v1965 = vmul.f32 %v1848, %v1964
        %v1966 = vsub.f32 1.0, %v1965
        %v1967 = vmul.f32 %v1964, %v1966
        %v1968 = vadd.f32 %v1964, %v1967
        %vm1969 = vweird.f32 %v1848
        %vm1970 = vweird.f32 %v1964
        %vm1971 = vmor %vm1969, %vm1970
        %v1972 = vsel %vm1971, %v1964, %v1968
        %v1973 = vand.u32 2147483647, %v1848
        %vm1974 = vcmp.eq.f32.partialorder %v1973, 8.507059e+37
        %v1975 = vand.u32 %v1848, 2147483648
        %v1976 = vor.u32 1.1754944e-38, %v1975
        %v1977 = vsel %vm1974, %v1976, %v1972
        %v1978 = vmul.f32 1.0, %v1977
        %v1979 = vrcp.pop %v1849
        %v1980 = vmul.f32 %v1849, %v1979
        %v1981 = vsub.f32 1.0, %v1980
        %v1982 = vmul.f32 %v1979, %v1981
        %v1983 = vadd.f32 %v1979, %v1982
        %vm1984 = vweird.f32 %v1849
        %vm1985 = vweird.f32 %v1979
        %vm1986 = vmor %vm1984, %vm1985
        %v1987 = vsel %vm1986, %v1979, %v1983
        %v1988 = vand.u32 2147483647, %v1849
        %vm1989 = vcmp.eq.f32.partialorder %v1988, 8.507059e+37
        %v1990 = vand.u32 %v1849, 2147483648
        %v1991 = vor.u32 1.1754944e-38, %v1990
        %v1992 = vsel %vm1989, %v1991, %v1987
        %v1993 = vmul.f32 1.0, %v1992
        %v1994 = vrcp.pop %v1850
        %v1995 = vmul.f32 %v1850, %v1994
        %v1996 = vsub.f32 1.0, %v1995
        %v1997 = vmul.f32 %v1994, %v1996
        %v1998 = vadd.f32 %v1994, %v1997
        %vm1999 = vweird.f32 %v1850
        %vm2000 = vweird.f32 %v1994
        %vm2001 = vmor %vm1999, %vm2000
        %v2002 = vsel %vm2001, %v1994, %v1998
        %v2003 = vand.u32 2147483647, %v1850
        %vm2004 = vcmp.eq.f32.partialorder %v2003, 8.507059e+37
        %v2005 = vand.u32 %v1850, 2147483648
        %v2006 = vor.u32 1.1754944e-38, %v2005
        %v2007 = vsel %vm2004, %v2006, %v2002
        %v2008 = vmul.f32 1.0, %v2007
        %v2009 = vrcp.pop %v1851
        %v2010 = vmul.f32 %v1851, %v2009
        %v2011 = vsub.f32 1.0, %v2010
        %v2012 = vmul.f32 %v2009, %v2011
        %v2013 = vadd.f32 %v2009, %v2012
        %vm2014 = vweird.f32 %v1851
        %vm2015 = vweird.f32 %v2009
        %vm2016 = vmor %vm2014, %vm2015
        %v2017 = vsel %vm2016, %v2009, %v2013
        %v2018 = vand.u32 2147483647, %v1851
        %vm2019 = vcmp.eq.f32.partialorder %v2018, 8.507059e+37
        %v2020 = vand.u32 %v1851, 2147483648
        %v2021 = vor.u32 1.1754944e-38, %v2020
        %v2022 = vsel %vm2019, %v2021, %v2017
        %v2023 = vmul.f32 1.0, %v2022
        %v2024 = vrcp.pop %v1852
        %v2025 = vmul.f32 %v1852, %v2024
        %v2026 = vsub.f32 1.0, %v2025
        %v2027 = vmul.f32 %v2024, %v2026
        %v2028 = vadd.f32 %v2024, %v2027
        %vm2029 = vweird.f32 %v1852
        %vm2030 = vweird.f32 %v2024
        %vm2031 = vmor %vm2029, %vm2030
        %v2032 = vsel %vm2031, %v2024, %v2028
        %v2033 = vand.u32 2147483647, %v1852
        %vm2034 = vcmp.eq.f32.partialorder %v2033, 8.507059e+37
        %v2035 = vand.u32 %v1852, 2147483648
        %v2036 = vor.u32 1.1754944e-38, %v2035
        %v2037 = vsel %vm2034, %v2036, %v2032
        %v2038 = vmul.f32 1.0, %v2037
        %v2039 = vrcp.pop %v1853
        %v2040 = vmul.f32 %v1853, %v2039
        %v2041 = vsub.f32 1.0, %v2040
        %v2042 = vmul.f32 %v2039, %v2041
        %v2043 = vadd.f32 %v2039, %v2042
        %vm2044 = vweird.f32 %v1853
        %vm2045 = vweird.f32 %v2039
        %vm2046 = vmor %vm2044, %vm2045
        %v2047 = vsel %vm2046, %v2039, %v2043
        %v2048 = vand.u32 2147483647, %v1853
        %vm2049 = vcmp.eq.f32.partialorder %v2048, 8.507059e+37
        %v2050 = vand.u32 %v1853, 2147483648
        %v2051 = vor.u32 1.1754944e-38, %v2050
        %v2052 = vsel %vm2049, %v2051, %v2047
        %v2053 = vmul.f32 1.0, %v2052
        %v2054 = vrcp.pop %v1854
        %v2055 = vmul.f32 %v1854, %v2054
        %v2056 = vsub.f32 1.0, %v2055
        %v2057 = vmul.f32 %v2054, %v2056
        %v2058 = vadd.f32 %v2054, %v2057
        %vm2059 = vweird.f32 %v1854
        %vm2060 = vweird.f32 %v2054
        %vm2061 = vmor %vm2059, %vm2060
        %v2062 = vsel %vm2061, %v2054, %v2058
        %v2063 = vand.u32 2147483647, %v1854
        %vm2064 = vcmp.eq.f32.partialorder %v2063, 8.507059e+37
        %v2065 = vand.u32 %v1854, 2147483648
        %v2066 = vor.u32 1.1754944e-38, %v2065
        %v2067 = vsel %vm2064, %v2066, %v2062
        %v2068 = vmul.f32 1.0, %v2067
        %v2069 = vrcp.pop %v1855
        %v2070 = vmul.f32 %v1855, %v2069
        %v2071 = vsub.f32 1.0, %v2070
        %v2072 = vmul.f32 %v2069, %v2071
        %v2073 = vadd.f32 %v2069, %v2072
        %vm2074 = vweird.f32 %v1855
        %vm2075 = vweird.f32 %v2069
        %vm2076 = vmor %vm2074, %vm2075
        %v2077 = vsel %vm2076, %v2069, %v2073
        %v2078 = vand.u32 2147483647, %v1855
        %vm2079 = vcmp.eq.f32.partialorder %v2078, 8.507059e+37
        %v2080 = vand.u32 %v1855, 2147483648
        %v2081 = vor.u32 1.1754944e-38, %v2080
        %v2082 = vsel %vm2079, %v2081, %v2077
        %v2083 = vmul.f32 1.0, %v2082
        %v2084 = vrcp.pop %v1856
        %v2085 = vmul.f32 %v1856, %v2084
        %v2086 = vsub.f32 1.0, %v2085
        %v2087 = vmul.f32 %v2084, %v2086
        %v2088 = vadd.f32 %v2084, %v2087
        %vm2089 = vweird.f32 %v1856
        %vm2090 = vweird.f32 %v2084
        %vm2091 = vmor %vm2089, %vm2090
        %v2092 = vsel %vm2091, %v2084, %v2088
        %v2093 = vand.u32 2147483647, %v1856
        %vm2094 = vcmp.eq.f32.partialorder %v2093, 8.507059e+37
        %v2095 = vand.u32 %v1856, 2147483648
        %v2096 = vor.u32 1.1754944e-38, %v2095
        %v2097 = vsel %vm2094, %v2096, %v2092
        %v2098 = vmul.f32 1.0, %v2097
        %v2099 = vrcp.pop %v1857
        %v2100 = vmul.f32 %v1857, %v2099
        %v2101 = vsub.f32 1.0, %v2100
        %v2102 = vmul.f32 %v2099, %v2101
        %v2103 = vadd.f32 %v2099, %v2102
        %vm2104 = vweird.f32 %v1857
        %vm2105 = vweird.f32 %v2099
        %vm2106 = vmor %vm2104, %vm2105
        %v2107 = vsel %vm2106, %v2099, %v2103
        %v2108 = vand.u32 2147483647, %v1857
        %vm2109 = vcmp.eq.f32.partialorder %v2108, 8.507059e+37
        %v2110 = vand.u32 %v1857, 2147483648
        %v2111 = vor.u32 1.1754944e-38, %v2110
        %v2112 = vsel %vm2109, %v2111, %v2107
        %v2113 = vmul.f32 1.0, %v2112
        %v2114 = vrcp.pop %v1858
        %v2115 = vmul.f32 %v1858, %v2114
        %v2116 = vsub.f32 1.0, %v2115
        %v2117 = vmul.f32 %v2114, %v2116
        %v2118 = vadd.f32 %v2114, %v2117
        %vm2119 = vweird.f32 %v1858
        %vm2120 = vweird.f32 %v2114
        %vm2121 = vmor %vm2119, %vm2120
        %v2122 = vsel %vm2121, %v2114, %v2118
        %v2123 = vand.u32 2147483647, %v1858
        %vm2124 = vcmp.eq.f32.partialorder %v2123, 8.507059e+37
        %v2125 = vand.u32 %v1858, 2147483648
        %v2126 = vor.u32 1.1754944e-38, %v2125
        %v2127 = vsel %vm2124, %v2126, %v2122
        %v2128 = vmul.f32 1.0, %v2127
        %v2129 = vrcp.pop %v1859
        %v2130 = vmul.f32 %v1859, %v2129
        %v2131 = vsub.f32 1.0, %v2130
        %v2132 = vmul.f32 %v2129, %v2131
        %v2133 = vadd.f32 %v2129, %v2132
        %vm2134 = vweird.f32 %v1859
        %vm2135 = vweird.f32 %v2129
        %vm2136 = vmor %vm2134, %vm2135
        %v2137 = vsel %vm2136, %v2129, %v2133
        %v2138 = vand.u32 2147483647, %v1859
        %vm2139 = vcmp.eq.f32.partialorder %v2138, 8.507059e+37
        %v2140 = vand.u32 %v1859, 2147483648
        %v2141 = vor.u32 1.1754944e-38, %v2140
        %v2142 = vsel %vm2139, %v2141, %v2137
        %v2143 = vmul.f32 1.0, %v2142
        %v2144 = vrcp.pop %v1860
        %v2145 = vmul.f32 %v1860, %v2144
        %v2146 = vsub.f32 1.0, %v2145
        %v2147 = vmul.f32 %v2144, %v2146
        %v2148 = vadd.f32 %v2144, %v2147
        %vm2149 = vweird.f32 %v1860
        %vm2150 = vweird.f32 %v2144
        %vm2151 = vmor %vm2149, %vm2150
        %v2152 = vsel %vm2151, %v2144, %v2148
        %v2153 = vand.u32 2147483647, %v1860
        %vm2154 = vcmp.eq.f32.partialorder %v2153, 8.507059e+37
        %v2155 = vand.u32 %v1860, 2147483648
        %v2156 = vor.u32 1.1754944e-38, %v2155
        %v2157 = vsel %vm2154, %v2156, %v2152
        %v2158 = vmul.f32 1.0, %v2157
        %v2159 = vrcp.pop %v1861
        %v2160 = vmul.f32 %v1861, %v2159
        %v2161 = vsub.f32 1.0, %v2160
        %v2162 = vmul.f32 %v2159, %v2161
        %v2163 = vadd.f32 %v2159, %v2162
        %vm2164 = vweird.f32 %v1861
        %vm2165 = vweird.f32 %v2159
        %vm2166 = vmor %vm2164, %vm2165
        %v2167 = vsel %vm2166, %v2159, %v2163
        %v2168 = vand.u32 2147483647, %v1861
        %vm2169 = vcmp.eq.f32.partialorder %v2168, 8.507059e+37
        %v2170 = vand.u32 %v1861, 2147483648
        %v2171 = vor.u32 1.1754944e-38, %v2170
        %v2172 = vsel %vm2169, %v2171, %v2167
        %v2173 = vmul.f32 1.0, %v2172
        %v2174 = vrcp.pop %v1862
        %v2175 = vmul.f32 %v1862, %v2174
        %v2176 = vsub.f32 1.0, %v2175
        %v2177 = vmul.f32 %v2174, %v2176
        %v2178 = vadd.f32 %v2174, %v2177
        %vm2179 = vweird.f32 %v1862
        %vm2180 = vweird.f32 %v2174
        %vm2181 = vmor %vm2179, %vm2180
        %v2182 = vsel %vm2181, %v2174, %v2178
        %v2183 = vand.u32 2147483647, %v1862
        %vm2184 = vcmp.eq.f32.partialorder %v2183, 8.507059e+37
        %v2185 = vand.u32 %v1862, 2147483648
        %v2186 = vor.u32 1.1754944e-38, %v2185
        %v2187 = vsel %vm2184, %v2186, %v2182
        %v2188 = vmul.f32 1.0, %v2187
        %v2189 = vrcp.pop %v1863
        %v2190 = vmul.f32 %v1863, %v2189
        %v2191 = vsub.f32 1.0, %v2190
        %v2192 = vmul.f32 %v2189, %v2191
        %v2193 = vadd.f32 %v2189, %v2192
        %vm2194 = vweird.f32 %v1863
        %vm2195 = vweird.f32 %v2189
        %vm2196 = vmor %vm2194, %vm2195
        %v2197 = vsel %vm2196, %v2189, %v2193
        %v2198 = vand.u32 2147483647, %v1863
        %vm2199 = vcmp.eq.f32.partialorder %v2198, 8.507059e+37
        %v2200 = vand.u32 %v1863, 2147483648
        %v2201 = vor.u32 1.1754944e-38, %v2200
        %v2202 = vsel %vm2199, %v2201, %v2197
        %v2203 = vmul.f32 1.0, %v2202
        %v2204 = vrcp.pop %v1864
        %v2205 = vmul.f32 %v1864, %v2204
        %v2206 = vsub.f32 1.0, %v2205
        %v2207 = vmul.f32 %v2204, %v2206
        %v2208 = vadd.f32 %v2204, %v2207
        %vm2209 = vweird.f32 %v1864
        %vm2210 = vweird.f32 %v2204
        %vm2211 = vmor %vm2209, %vm2210
        %v2212 = vsel %vm2211, %v2204, %v2208
        %v2213 = vand.u32 2147483647, %v1864
        %vm2214 = vcmp.eq.f32.partialorder %v2213, 8.507059e+37
        %v2215 = vand.u32 %v1864, 2147483648
        %v2216 = vor.u32 1.1754944e-38, %v2215
        %v2217 = vsel %vm2214, %v2216, %v2212
        %v2218 = vmul.f32 1.0, %v2217
        %v2219 = vrcp.pop %v1865
        %v2220 = vmul.f32 %v1865, %v2219
        %v2221 = vsub.f32 1.0, %v2220
        %v2222 = vmul.f32 %v2219, %v2221
        %v2223 = vadd.f32 %v2219, %v2222
        %vm2224 = vweird.f32 %v1865
        %vm2225 = vweird.f32 %v2219
        %vm2226 = vmor %vm2224, %vm2225
        %v2227 = vsel %vm2226, %v2219, %v2223
        %v2228 = vand.u32 2147483647, %v1865
        %vm2229 = vcmp.eq.f32.partialorder %v2228, 8.507059e+37
        %v2230 = vand.u32 %v1865, 2147483648
        %v2231 = vor.u32 1.1754944e-38, %v2230
        %v2232 = vsel %vm2229, %v2231, %v2227
        %v2233 = vmul.f32 1.0, %v2232
        %v2234 = vrcp.pop %v1866
        %v2235 = vmul.f32 %v1866, %v2234
        %v2236 = vsub.f32 1.0, %v2235
        %v2237 = vmul.f32 %v2234, %v2236
        %v2238 = vadd.f32 %v2234, %v2237
        %vm2239 = vweird.f32 %v1866
        %vm2240 = vweird.f32 %v2234
        %vm2241 = vmor %vm2239, %vm2240
        %v2242 = vsel %vm2241, %v2234, %v2238
        %v2243 = vand.u32 2147483647, %v1866
        %vm2244 = vcmp.eq.f32.partialorder %v2243, 8.507059e+37
        %v2245 = vand.u32 %v1866, 2147483648
        %v2246 = vor.u32 1.1754944e-38, %v2245
        %v2247 = vsel %vm2244, %v2246, %v2242
        %v2248 = vmul.f32 1.0, %v2247
        %v2249 = vrcp.pop %v1867
        %v2250 = vmul.f32 %v1867, %v2249
        %v2251 = vsub.f32 1.0, %v2250
        %v2252 = vmul.f32 %v2249, %v2251
        %v2253 = vadd.f32 %v2249, %v2252
        %vm2254 = vweird.f32 %v1867
        %vm2255 = vweird.f32 %v2249
        %vm2256 = vmor %vm2254, %vm2255
        %v2257 = vsel %vm2256, %v2249, %v2253
        %v2258 = vand.u32 2147483647, %v1867
        %vm2259 = vcmp.eq.f32.partialorder %v2258, 8.507059e+37
        %v2260 = vand.u32 %v1867, 2147483648
        %v2261 = vor.u32 1.1754944e-38, %v2260
        %v2262 = vsel %vm2259, %v2261, %v2257
        %v2263 = vmul.f32 1.0, %v2262
        %v2264 = vrcp.pop %v1868
        %v2265 = vmul.f32 %v1868, %v2264
        %v2266 = vsub.f32 1.0, %v2265
        %v2267 = vmul.f32 %v2264, %v2266
        %v2268 = vadd.f32 %v2264, %v2267
        %vm2269 = vweird.f32 %v1868
        %vm2270 = vweird.f32 %v2264
        %vm2271 = vmor %vm2269, %vm2270
        %v2272 = vsel %vm2271, %v2264, %v2268
        %v2273 = vand.u32 2147483647, %v1868
        %vm2274 = vcmp.eq.f32.partialorder %v2273, 8.507059e+37
        %v2275 = vand.u32 %v1868, 2147483648
        %v2276 = vor.u32 1.1754944e-38, %v2275
        %v2277 = vsel %vm2274, %v2276, %v2272
        %v2278 = vmul.f32 1.0, %v2277
        %v2279 = vrcp.pop %v1869
        %v2280 = vmul.f32 %v1869, %v2279
        %v2281 = vsub.f32 1.0, %v2280
        %v2282 = vmul.f32 %v2279, %v2281
        %v2283 = vadd.f32 %v2279, %v2282
        %vm2284 = vweird.f32 %v1869
        %vm2285 = vweird.f32 %v2279
        %vm2286 = vmor %vm2284, %vm2285
        %v2287 = vsel %vm2286, %v2279, %v2283
        %v2288 = vand.u32 2147483647, %v1869
        %vm2289 = vcmp.eq.f32.partialorder %v2288, 8.507059e+37
        %v2290 = vand.u32 %v1869, 2147483648
        %v2291 = vor.u32 1.1754944e-38, %v2290
        %v2292 = vsel %vm2289, %v2291, %v2287
        %v2293 = vmul.f32 1.0, %v2292
        %v2294 = vrcp.pop %v1870
        %v2295 = vmul.f32 %v1870, %v2294
        %v2296 = vsub.f32 1.0, %v2295
        %v2297 = vmul.f32 %v2294, %v2296
        %v2298 = vadd.f32 %v2294, %v2297
        %vm2299 = vweird.f32 %v1870
        %vm2300 = vweird.f32 %v2294
        %vm2301 = vmor %vm2299, %vm2300
        %v2302 = vsel %vm2301, %v2294, %v2298
        %v2303 = vand.u32 2147483647, %v1870
        %vm2304 = vcmp.eq.f32.partialorder %v2303, 8.507059e+37
        %v2305 = vand.u32 %v1870, 2147483648
        %v2306 = vor.u32 1.1754944e-38, %v2305
        %v2307 = vsel %vm2304, %v2306, %v2302
        %v2308 = vmul.f32 1.0, %v2307
        %v2309 = vrcp.pop %v1871
        %v2310 = vmul.f32 %v1871, %v2309
        %v2311 = vsub.f32 1.0, %v2310
        %v2312 = vmul.f32 %v2309, %v2311
        %v2313 = vadd.f32 %v2309, %v2312
        %vm2314 = vweird.f32 %v1871
        %vm2315 = vweird.f32 %v2309
        %vm2316 = vmor %vm2314, %vm2315
        %v2317 = vsel %vm2316, %v2309, %v2313
        %v2318 = vand.u32 2147483647, %v1871
        %vm2319 = vcmp.eq.f32.partialorder %v2318, 8.507059e+37
        %v2320 = vand.u32 %v1871, 2147483648
        %v2321 = vor.u32 1.1754944e-38, %v2320
        %v2322 = vsel %vm2319, %v2321, %v2317
        %v2323 = vmul.f32 1.0, %v2322
        %v2324 = vrcp.pop %v1872
        %v2325 = vmul.f32 %v1872, %v2324
        %v2326 = vsub.f32 1.0, %v2325
        %v2327 = vmul.f32 %v2324, %v2326
        %v2328 = vadd.f32 %v2324, %v2327
        %vm2329 = vweird.f32 %v1872
        %vm2330 = vweird.f32 %v2324
        %vm2331 = vmor %vm2329, %vm2330
        %v2332 = vsel %vm2331, %v2324, %v2328
        %v2333 = vand.u32 2147483647, %v1872
        %vm2334 = vcmp.eq.f32.partialorder %v2333, 8.507059e+37
        %v2335 = vand.u32 %v1872, 2147483648
        %v2336 = vor.u32 1.1754944e-38, %v2335
        %v2337 = vsel %vm2334, %v2336, %v2332
        %v2338 = vmul.f32 1.0, %v2337
        %v2339 = vrcp.pop %v1873
        %v2340 = vmul.f32 %v1873, %v2339
        %v2341 = vsub.f32 1.0, %v2340
        %v2342 = vmul.f32 %v2339, %v2341
        %v2343 = vadd.f32 %v2339, %v2342
        %vm2344 = vweird.f32 %v1873
        %vm2345 = vweird.f32 %v2339
        %vm2346 = vmor %vm2344, %vm2345
        %v2347 = vsel %vm2346, %v2339, %v2343
        %v2348 = vand.u32 2147483647, %v1873
        %vm2349 = vcmp.eq.f32.partialorder %v2348, 8.507059e+37
        %v2350 = vand.u32 %v1873, 2147483648
        %v2351 = vor.u32 1.1754944e-38, %v2350
        %v2352 = vsel %vm2349, %v2351, %v2347
        %v2353 = vmul.f32 1.0, %v2352
        %s2354 = scalar_lea.vmem %s339, 72
        %v2355 = vld [vmem:[%s2354 + $0x3] sm:$0xff]
        %v2356 = vld [vmem:[%s2354 + $0xb] sm:$0xff]
        %v2357 = vld [vmem:[%s2354 + $0x1b] sm:$0xff]
        %v2358 = vld [vmem:[%s2354 + $0x23] sm:$0xff]
        %v2359 = vld [vmem:[%s2354 + $0x33] sm:$0xff]
        %v2360 = vld [vmem:[%s2354 + $0x3b] sm:$0xff]
        %v2361 = vld [vmem:[%s2354 + $0x4b] sm:$0xff]
        %v2362 = vld [vmem:[%s2354 + $0x53] sm:$0xff]
        %v2363 = vld [vmem:[%s2354 + $0x63] sm:$0xff]
        %v2364 = vld [vmem:[%s2354 + $0x6b] sm:$0xff]
        %v2365 = vld [vmem:[%s2354 + $0x7b] sm:$0xff]
        %v2366 = vld [vmem:[%s2354 + $0x83] sm:$0xff]
        %v2367 = vld [vmem:[%s2354 + $0x93] sm:$0xff]
        %v2368 = vld [vmem:[%s2354 + $0x9b] sm:$0xff]
        %v2369 = vld [vmem:[%s2354 + $0xab] sm:$0xff]
        %v2370 = vld [vmem:[%s2354 + $0xb3] sm:$0xff]
        %v2371 = vld [vmem:[%s2354 + $0xc3] sm:$0xff]
        %v2372 = vld [vmem:[%s2354 + $0xcb] sm:$0xff]
        %v2373 = vld [vmem:[%s2354 + $0xdb] sm:$0xff]
        %v2374 = vld [vmem:[%s2354 + $0xe3] sm:$0xff]
        %v2375 = vld [vmem:[%s2354 + $0xf3] sm:$0xff]
        %v2376 = vld [vmem:[%s2354 + $0xfb] sm:$0xff]
        %v2377 = vld [vmem:[%s2354 + $0x10b] sm:$0xff]
        %v2378 = vld [vmem:[%s2354 + $0x113] sm:$0xff]
        %v2379 = vld [vmem:[%s2354 + $0x123] sm:$0xff]
        %v2380 = vld [vmem:[%s2354 + $0x12b] sm:$0xff]
        %v2381 = vld [vmem:[%s357 + $0x3] sm:$0xff]
        %v2382 = vld [vmem:[%s357 + $0xb] sm:$0xff]
        %v2383 = vld [vmem:[%s357 + $0x1b] sm:$0xff]
        %v2384 = vld [vmem:[%s357 + $0x23] sm:$0xff]
        %v2385 = vld [vmem:[%s357 + $0x33] sm:$0xff]
        %v2386 = vld [vmem:[%s357 + $0x3b] sm:$0xff]
        %v2387 = vmul.f32 %v1888, %v2355
        %v2388 = vmul.f32 %v1903, %v2356
        %v2389 = vmul.f32 %v1918, %v2357
        %v2390 = vmul.f32 %v1933, %v2358
        %v2391 = vmul.f32 %v1948, %v2359
        %v2392 = vmul.f32 %v1963, %v2360
        %v2393 = vmul.f32 %v1978, %v2361
        %v2394 = vmul.f32 %v1993, %v2362
        %v2395 = vmul.f32 %v2008, %v2363
        %v2396 = vmul.f32 %v2023, %v2364
        %v2397 = vmul.f32 %v2038, %v2365
        %v2398 = vmul.f32 %v2053, %v2366
        %v2399 = vmul.f32 %v2068, %v2367
        %v2400 = vmul.f32 %v2083, %v2368
        %v2401 = vmul.f32 %v2098, %v2369
        %v2402 = vmul.f32 %v2113, %v2370
        %v2403 = vmul.f32 %v2128, %v2371
        %v2404 = vmul.f32 %v2143, %v2372
        %v2405 = vmul.f32 %v2158, %v2373
        %v2406 = vmul.f32 %v2173, %v2374
        %v2407 = vmul.f32 %v2188, %v2375
        %v2408 = vmul.f32 %v2203, %v2376
        %v2409 = vmul.f32 %v2218, %v2377
        %v2410 = vmul.f32 %v2233, %v2378
        %v2411 = vmul.f32 %v2248, %v2379
        %v2412 = vmul.f32 %v2263, %v2380
        %2413 = vst.msk [vmem:[%s324] sm:$0xff] %vm925, %v2387
        %2414 = vst.msk [vmem:[%s324 + $0x8] sm:$0xff] %vm925, %v2388
        %2415 = vst.msk [vmem:[%s324 + $0x10] sm:$0xff] %vm925, %v2389
        %2416 = vst.msk [vmem:[%s324 + $0x18] sm:$0xff] %vm925, %v2390
        %2417 = vst.msk [vmem:[%s324 + $0x20] sm:$0xff] %vm925, %v2391
        %2418 = vst.msk [vmem:[%s324 + $0x28] sm:$0xff] %vm925, %v2392
        %2419 = vst.msk [vmem:[%s324 + $0x30] sm:$0xff] %vm925, %v2393
        %2420 = vst.msk [vmem:[%s324 + $0x38] sm:$0xff] %vm925, %v2394
        %2421 = vst.msk [vmem:[%s324 + $0x40] sm:$0xff] %vm925, %v2395
        %2422 = vst.msk [vmem:[%s324 + $0x48] sm:$0xff] %vm925, %v2396
        %2423 = vst.msk [vmem:[%s324 + $0x50] sm:$0xff] %vm925, %v2397
        %2424 = vst.msk [vmem:[%s324 + $0x58] sm:$0xff] %vm925, %v2398
        %2425 = vst.msk [vmem:[%s324 + $0x60] sm:$0xff] %vm925, %v2399
        %2426 = vst.msk [vmem:[%s324 + $0x68] sm:$0xff] %vm925, %v2400
        %2427 = vst.msk [vmem:[%s324 + $0x70] sm:$0xff] %vm925, %v2401
        %2428 = vst.msk [vmem:[%s324 + $0x78] sm:$0xff] %vm925, %v2402
        %2429 = vst.msk [vmem:[%s324 + $0x80] sm:$0xff] %vm925, %v2403
        %2430 = vst.msk [vmem:[%s324 + $0x88] sm:$0xff] %vm925, %v2404
        %2431 = vst.msk [vmem:[%s324 + $0x90] sm:$0xff] %vm925, %v2405
        %2432 = vst.msk [vmem:[%s324 + $0x98] sm:$0xff] %vm925, %v2406
        %2433 = vst.msk [vmem:[%s324 + $0xa0] sm:$0xff] %vm925, %v2407
        %2434 = vst.msk [vmem:[%s324 + $0xa8] sm:$0xff] %vm925, %v2408
        %2435 = vst.msk [vmem:[%s324 + $0xb0] sm:$0xff] %vm925, %v2409
        %2436 = vst.msk [vmem:[%s324 + $0xb8] sm:$0xff] %vm925, %v2410
        %2437 = vst.msk [vmem:[%s324 + $0xc0] sm:$0xff] %vm925, %v2411
        %2438 = vst.msk [vmem:[%s324 + $0xc8] sm:$0xff] %vm925, %v2412
        %v2439 = vmul.f32 %v2278, %v2381
        %v2440 = vmul.f32 %v2293, %v2382
        %v2441 = vmul.f32 %v2308, %v2383
        %v2442 = vmul.f32 %v2323, %v2384
        %v2443 = vmul.f32 %v2338, %v2385
        %v2444 = vmul.f32 %v2353, %v2386
        %s2445 = scalar_lea.vmem %s324, 208 [#allocation3]
        %2446 = vst.msk [vmem:[%s2445] sm:$0xff] %vm925, %v2439
        %2447 = vst.msk [vmem:[%s2445 + $0x8] sm:$0xff] %vm925, %v2440
        %2448 = vst.msk [vmem:[%s2445 + $0x10] sm:$0xff] %vm925, %v2441
        %2449 = vst.msk [vmem:[%s2445 + $0x18] sm:$0xff] %vm925, %v2442
        %2450 = vst.msk [vmem:[%s2445 + $0x20] sm:$0xff] %vm925, %v2443
        %2451 = vst.msk [vmem:[%s2445 + $0x28] sm:$0xff] %vm925, %v2444
        %s2452 = sand.u32 %s186, 1
        %s2453 = scalar_lea.sflag [#allocation4], %s2452
        %s2454 = sand.u32 %s186, 1
        %s2455 = smul.addr %s2454, 256
        %s2456 = scalar_lea.vmem [#allocation3], %s2455
        // Predicated region
        $region45: #{tpu_custom_call.1} parent=43 // pred_check
          %p2457 = pneg %p196
        $region46: #{tpu_custom_call.1} parent=43 // pred_check_branch
          %2459 = sbr.rel (%p2457) target = $region48
        $region47: #{tpu_custom_call.1} parent=43 // pred_region
          %s2460 = smul.u32 16, %s25
          %2462 = vsyncadd %s2453, 0
          %s2463 = smul.addr %s2460, 2
          %s2464 = smul.addr %s24, 32
          %s2465 = sadd.s32 %s2463, %s2464
          %s2466 = smul.addr %s2465, 8
          %s2467 = scalar_lea.hbm %s6, %s2466
          %s2468 = sshll.u32 %s2456, 4
          %s2469 = int_to_ptr.vmem [resolvable:$true] %s2468
          %s2470 = sshll.u32 %s2467, 4
          %s2471 = int_to_ptr.hbm [resolvable:$true] %s2470
          %2476 = dma.vmem_to_hbm [thread:$0]  %s2469, 4096, %s2471, %s2453, 128, 128, 8
        $region48: #{tpu_custom_call.1} parent=43 // pred_fallthru
          _
      $region44: #{tpu_custom_call.1} parent=5 // pred_fallthru
        _
      %p2477 = scmp.le.s32.totalorder 2, %s15
      // Predicated region
      $region49: #{tpu_custom_call.1} parent=5 // pred_check
        %p2478 = pneg %p2477
      $region50: #{tpu_custom_call.1} parent=5 // pred_check_branch
        %2480 = sbr.rel (%p2478) target = $region52
      $region51: #{tpu_custom_call.1} parent=5 // pred_region
        %s2481 = ssub.s32 %s15, 2
        // Predicated region
        $region53: #{tpu_custom_call.1} parent=51 // pred_check
          %p2482 = pneg %p202
        $region54: #{tpu_custom_call.1} parent=51 // pred_check_branch
          %2484 = sbr.rel (%p2482) target = $region56
        $region55: #{tpu_custom_call.1} parent=51 // pred_region
          %s2485 = sand.u32 %s187, 1
          %s2486 = scalar_lea.sflag [#allocation4], %s2485
          %s2487 = sand.u32 %s187, 1
          %s2488 = smul.addr %s2487, 256
          %s2489 = scalar_lea.vmem [#allocation3], %s2488
          %2491 = dma.done %s2486, 4096
        $region56: #{tpu_custom_call.1} parent=51 // pred_fallthru
          _
      $region52: #{tpu_custom_call.1} parent=5 // pred_fallthru
        _
    $region6: #{tpu_custom_call.1} parent=1 // loop_footer
      %s19 = sadd.s32 1, %s15
    $region7: #{tpu_custom_call.1} parent=1 // loop_footer_branch
      %14 = sbr.rel target = $region3
    $region8: #{tpu_custom_call.1} parent=1 // loop_exit
      _
    %2492 = vsyncpa [#allocation4], 1
    %s2493 = scalar_lea.sflag [#allocation4], 1
    %2494 = vsyncpa %s2493, 1

</llo_original>
